<compile_context>
chip_gen: v7x
topology: tpu7x:2x2x1
jax: 0.10.0
libtpu: 0.0.40
codegen_flags: <defaults>
</compile_context>

<pallas_src>
import math
import functools

import jax
import jax.numpy as jnp
from jax import lax
from jax.experimental import pallas as pl
from jax.experimental.pallas import tpu as pltpu  # noqa: F401  (kept for TPU-specific tuning hooks)

# ---- model config (small, consistent with the module) ----
HIDDEN = 32
NUM_HEADS = 4
D_K = HIDDEN // NUM_HEADS
BATCH = 2
SEQ = 8

NEG_INF = -1.0e9     # matches torch masked_fill value
CROSS_NEG = -2.0e9   # cross-batch bias; strictly below NEG_INF so fully-masked rows
                     # still normalize over their own batch's keys (PyTorch semantics)


# ---------------- fused Pallas kernel ----------------

def mhatt_kernel(*refs, num_heads, hidden, self_attention):
    """Whole forward in one invocation over the flattened (B*S, H) batch.

    self_attention=True : refs = (x, bias, w_qkv, b_qkv, w_m, b_m, out)
    self_attention=False: refs = (q, k, v, bias, w_qkv, b_qkv, w_m, b_m, out)

    x/q/k/v : (B*S, H)       flattened inputs
    bias    : (B*S, B*S)     additive mask (block-diagonal batch structure + key mask)
    w_qkv   : (H, 3H)        [Wq^T * scale | Wk^T | Wv^T]
    b_qkv   : (1, 3H)        [bq * scale   | bk   | bv  ]
    w_m     : (H, H)         Wm^T
    b_m     : (1, H)         bm
    out     : (B*S, H)
    """
    if self_attention:
        x_ref, bias_ref, wqkv_ref, bqkv_ref, wm_ref, bm_ref, o_ref = refs
    else:
        q_ref, k_ref, v_ref, bias_ref, wqkv_ref, bqkv_ref, wm_ref, bm_ref, o_ref = refs

    H = hidden
    dk = H // num_heads

    if self_attention:
        # One (B*S, H) @ (H, 3H) MXU matmul covers all three projections.
        qkv = jnp.dot(x_ref[...], wqkv_ref[...],
                      preferred_element_type=jnp.float32) + bqkv_ref[...]
        qp = qkv[:, 0:H]
        kp = qkv[:, H:2 * H]
        vp = qkv[:, 2 * H:3 * H]
    else:
        qp = jnp.dot(q_ref[...], wqkv_ref[:, 0:H],
                     preferred_element_type=jnp.float32) + bqkv_ref[:, 0:H]
        kp = jnp.dot(k_ref[...], wqkv_ref[:, H:2 * H],
                     preferred_element_type=jnp.float32) + bqkv_ref[:, H:2 * H]
        vp = jnp.dot(v_ref[...], wqkv_ref[:, 2 * H:3 * H],
                     preferred_element_type=jnp.float32) + bqkv_ref[:, 2 * H:3 * H]

    # Additive mask bias, built once in the wrapper, shared by every head.
    bias = bias_ref[...]                                   # (B*S, B*S)

    acc = None
    for h in range(num_heads):
        sl = slice(h * dk, (h + 1) * dk)
        qh, kh, vh = qp[:, sl], kp[:, sl], vp[:, sl]       # (B*S, dk) each

        # scores = qh @ kh^T ; softmax scale already folded into Wq^T / bq.
        scores = lax.dot_general(qh, kh, (((1,), (1,)), ((), ())),
                                 preferred_element_type=jnp.float32)   # (B*S, B*S)
        scores = scores + bias
        # numerically-stable softmax along the key axis
        scores = scores - jnp.max(scores, axis=-1, keepdims=True)
        e = jnp.exp(scores)
        att = e * pl.reciprocal(jnp.sum(e, axis=-1, keepdims=True), approx=True)
        # dropout(att) == identity in eval mode

        head_out = jnp.dot(att, vh, preferred_element_type=jnp.float32)  # (B*S, dk)
        # Per-head merge accumulation: sublane-aligned 8-row slice of Wm^T.
        part = jnp.dot(head_out, wm_ref[sl, :], preferred_element_type=jnp.float32)
        acc = part if acc is None else acc + part

    o_ref[...] = (acc + bm_ref[...]).astype(o_ref.dtype)


# ---------------- parameter preparation (one-time) ----------------

def prepare_params(params):
    """Transpose / concatenate weights once; fold the softmax scale into Wq^T / bq."""
    scale = 1.0 / math.sqrt(D_K)
    w_qkv = jnp.concatenate([params["linear_q_w"].T * scale,
                             params["linear_k_w"].T,
                             params["linear_v_w"].T], axis=1)            # (H, 3H)
    b_qkv = jnp.concatenate([params["linear_q_b"] * scale,
                             params["linear_k_b"],
                             params["linear_v_b"]])[None, :]             # (1, 3H)
    w_m = params["linear_merge_w"].T                                     # (H, H)
    b_m = params["linear_merge_b"][None, :]                              # (1, H)
    return (w_qkv, b_qkv, w_m, b_m)


# ---------------- wrappers ----------------

def _mask_bias(mask, batch, seq):
    """(B,1,1,S) bool mask -> (B*S, B*S) additive bias with batch block-diagonal."""
    m = mask.reshape(batch, seq)                                         # (Bk, S)
    cross = jnp.arange(batch)[:, None] != jnp.arange(batch)[None, :]     # (Bq, Bk)
    bias = jnp.where(cross[:, :, None], CROSS_NEG,
                     jnp.where(m[None, :, :], NEG_INF, 0.0))             # (Bq, Bk, S)
    bias = jnp.broadcast_to(bias[:, None, :, :], (batch, seq, batch, seq))
    return bias.reshape(batch * seq, batch * seq).astype(jnp.float32)


def _full_spec(shape):
    # Grid-less call: whole-array blocks, zero-arg index maps.
    return pl.BlockSpec(shape, lambda: (0,) * len(shape))


def _call_kernel(xs, bias, prep, self_attention, bs, hidden):
    w_qkv, b_qkv, w_m, b_m = prep
    operands = list(xs) + [bias, w_qkv, b_qkv, w_m, b_m]
    in_specs = [_full_spec(op.shape) for op in operands]
    kern = functools.partial(mhatt_kernel, num_heads=NUM_HEADS, hidden=hidden,
                             self_attention=self_attention)
    return pl.pallas_call(
        kern,
        out_shape=jax.ShapeDtypeStruct((bs, hidden), jnp.float32),
        in_specs=in_specs,
        out_specs=_full_spec((bs, hidden)),
    )(*operands)


@jax.jit
def mhatt_forward(prep, v, k, q, mask):
    """General (cross-attention capable) path. q/k/v: (B,S,H), mask: (B,1,1,S) bool."""
    B, S, H = q.shape
    bs = B * S
    bias = _mask_bias(mask, B, S)
    out = _call_kernel([q.reshape(bs, H), k.reshape(bs, H), v.reshape(bs, H)],
                       bias, prep, False, bs, H)
    return out.reshape(B, S, H)


@jax.jit
def mhatt_self_forward(prep, x, mask):
    """Self-attention fast path (q is k is v): one fused (B*S,H)@(H,3H) projection."""
    B, S, H = x.shape
    bs = B * S
    bias = _mask_bias(mask, B, S)
    out = _call_kernel([x.reshape(bs, H)], bias, prep, True, bs, H)
    return out.reshape(B, S, H)


# ---------------- pure-JAX reference for sanity ----------------

def mhatt_reference(params, v, k, q, mask):
    B, S, H = q.shape
    NH, dk = NUM_HEADS, H // NUM_HEADS

    def lin(x, name):
        return x @ params[name + "_w"].T + params[name + "_b"]

    vh = lin(v, "linear_v").reshape(B, S, NH, dk).transpose(0, 2, 1, 3)
    kh = lin(k, "linear_k").reshape(B, S, NH, dk).transpose(0, 2, 1, 3)
    qh = lin(q, "linear_q").reshape(B, S, NH, dk).transpose(0, 2, 1, 3)
    scores = jnp.einsum("bhqd,bhkd->bhqk", qh, kh) / math.sqrt(dk)
    scores = jnp.where(mask, NEG_INF, scores)
    att = jax.nn.softmax(scores, axis=-1)
    atted = jnp.einsum("bhqk,bhkd->bhqd", att, vh)
    atted = atted.transpose(0, 2, 1, 3).reshape(B, S, H)
    return lin(atted, "linear_merge")


# ---------------- main ----------------

if __name__ == "__main__":
    key = jax.random.PRNGKey(0)
    keys = jax.random.split(key, 12)

    bound = 1.0 / math.sqrt(HIDDEN)  # nn.Linear default init range
    params = {}
    for i, name in enumerate(["linear_v", "linear_k", "linear_q", "linear_merge"]):
        params[name + "_w"] = jax.random.uniform(
            keys[2 * i], (HIDDEN, HIDDEN), jnp.float32, -bound, bound)
        params[name + "_b"] = jax.random.uniform(
            keys[2 * i + 1], (HIDDEN,), jnp.float32, -bound, bound)

    q = jax.random.normal(keys[8], (BATCH, SEQ, HIDDEN), jnp.float32)
    k = jax.random.normal(keys[9], (BATCH, SEQ, HIDDEN), jnp.float32)
    v = jax.random.normal(keys[10], (BATCH, SEQ, HIDDEN), jnp.float32)

    # boolean mask (B, 1, 1, S): mask (True) the last 2 key positions of batch 1
    mask = jnp.zeros((BATCH, 1, 1, SEQ), dtype=bool)
    mask = mask.at[1, 0, 0, -2:].set(True)

    prep = prepare_params(params)   # one-time weight transpose/concat/scale-fold

    # Tolerance 2e-3 covers the approximate EUP reciprocal in the softmax denom.
    TOL = 2e-3

    # --- general (cross-attention) path ---
    out = jax.block_until_ready(mhatt_forward(prep, v, k, q, mask))
    ref = mhatt_reference(params, v, k, q, mask)
    assert out.shape == (BATCH, SEQ, HIDDEN)
    assert jnp.allclose(out, ref, atol=TOL, rtol=TOL), "general path mismatch vs reference"

    # --- self-attention fast path (q is k is v) ---
    out_sa = jax.block_until_ready(mhatt_self_forward(prep, q, mask))
    ref_sa = mhatt_reference(params, q, q, q, mask)
    assert out_sa.shape == (BATCH, SEQ, HIDDEN)
    assert jnp.allclose(out_sa, ref_sa, atol=TOL, rtol=TOL), "self-attn path mismatch vs reference"

    print("KERNEL_OK")
</pallas_src>

<mosaic_0001>
module attributes {stable_mosaic.version = 11 : i64} {
  func.func @mhatt_kernel(%arg0: memref<16x32xf32, #tpu.memory_space<vmem>>, %arg1: memref<16x32xf32, #tpu.memory_space<vmem>>, %arg2: memref<16x32xf32, #tpu.memory_space<vmem>>, %arg3: memref<16x16xf32, #tpu.memory_space<vmem>>, %arg4: memref<32x96xf32, #tpu.memory_space<vmem>>, %arg5: memref<1x96xf32, #tpu.memory_space<vmem>>, %arg6: memref<32x32xf32, #tpu.memory_space<vmem>>, %arg7: memref<1x32xf32, #tpu.memory_space<vmem>>, %arg8: memref<16x32xf32, #tpu.memory_space<vmem>>) attributes {dimension_semantics = [], scalar_prefetch = 0 : i64, scratch_operands = 0 : i64, tpu.core_type = #tpu.core_type<tc>} {
    %c0 = arith.constant 0 : index
    %c0_0 = arith.constant 0 : index
    %0 = vector.load %arg0[%c0, %c0_0] : memref<16x32xf32, #tpu.memory_space<vmem>>, vector<16x32xf32>
    %c0_1 = arith.constant 0 : index
    %c0_2 = arith.constant 0 : index
    %1 = vector.load %arg4[%c0_1, %c0_2] : memref<32x96xf32, #tpu.memory_space<vmem>>, vector<32x32xf32>
    %cst = arith.constant dense<0.000000e+00> : vector<16x32xf32>
    %2 = tpu.matmul %0, %1, %cst {dimension_numbers = #tpu.dot_dimension_numbers<[1], [0], [0], [1], [0, 0, 1, 1], [], []>} : vector<16x32xf32>, vector<32x32xf32>, vector<16x32xf32> -> vector<16x32xf32>
    %c0_3 = arith.constant 0 : index
    %c0_4 = arith.constant 0 : index
    %3 = vector.load %arg5[%c0_3, %c0_4] : memref<1x96xf32, #tpu.memory_space<vmem>>, vector<1x32xf32>
    %4 = vector.broadcast %3 : vector<1x32xf32> to vector<16x32xf32>
    %5 = arith.addf %2, %4 : vector<16x32xf32>
    %c0_5 = arith.constant 0 : index
    %c0_6 = arith.constant 0 : index
    %6 = vector.load %arg1[%c0_5, %c0_6] : memref<16x32xf32, #tpu.memory_space<vmem>>, vector<16x32xf32>
    %c0_7 = arith.constant 0 : index
    %c32 = arith.constant 32 : index
    %7 = vector.load %arg4[%c0_7, %c32] : memref<32x96xf32, #tpu.memory_space<vmem>>, vector<32x32xf32>
    %cst_8 = arith.constant dense<0.000000e+00> : vector<16x32xf32>
    %8 = tpu.matmul %6, %7, %cst_8 {dimension_numbers = #tpu.dot_dimension_numbers<[1], [0], [0], [1], [0, 0, 1, 1], [], []>} : vector<16x32xf32>, vector<32x32xf32>, vector<16x32xf32> -> vector<16x32xf32>
    %c0_9 = arith.constant 0 : index
    %c32_10 = arith.constant 32 : index
    %9 = vector.load %arg5[%c0_9, %c32_10] : memref<1x96xf32, #tpu.memory_space<vmem>>, vector<1x32xf32>
    %10 = vector.broadcast %9 : vector<1x32xf32> to vector<16x32xf32>
    %11 = arith.addf %8, %10 : vector<16x32xf32>
    %c0_11 = arith.constant 0 : index
    %c0_12 = arith.constant 0 : index
    %12 = vector.load %arg2[%c0_11, %c0_12] : memref<16x32xf32, #tpu.memory_space<vmem>>, vector<16x32xf32>
    %c0_13 = arith.constant 0 : index
    %c64 = arith.constant 64 : index
    %13 = vector.load %arg4[%c0_13, %c64] : memref<32x96xf32, #tpu.memory_space<vmem>>, vector<32x32xf32>
    %cst_14 = arith.constant dense<0.000000e+00> : vector<16x32xf32>
    %14 = tpu.matmul %12, %13, %cst_14 {dimension_numbers = #tpu.dot_dimension_numbers<[1], [0], [0], [1], [0, 0, 1, 1], [], []>} : vector<16x32xf32>, vector<32x32xf32>, vector<16x32xf32> -> vector<16x32xf32>
    %c0_15 = arith.constant 0 : index
    %c64_16 = arith.constant 64 : index
    %15 = vector.load %arg5[%c0_15, %c64_16] : memref<1x96xf32, #tpu.memory_space<vmem>>, vector<1x32xf32>
    %16 = vector.broadcast %15 : vector<1x32xf32> to vector<16x32xf32>
    %17 = arith.addf %14, %16 : vector<16x32xf32>
    %c0_17 = arith.constant 0 : index
    %c0_18 = arith.constant 0 : index
    %18 = vector.load %arg3[%c0_17, %c0_18] : memref<16x16xf32, #tpu.memory_space<vmem>>, vector<16x16xf32>
    %19 = vector.extract_strided_slice %5 {offsets = [0, 0], sizes = [16, 8], strides = [1, 1]} : vector<16x32xf32> to vector<16x8xf32>
    %20 = vector.extract_strided_slice %11 {offsets = [0, 0], sizes = [16, 8], strides = [1, 1]} : vector<16x32xf32> to vector<16x8xf32>
    %21 = vector.extract_strided_slice %17 {offsets = [0, 0], sizes = [16, 8], strides = [1, 1]} : vector<16x32xf32> to vector<16x8xf32>
    %cst_19 = arith.constant dense<0.000000e+00> : vector<16x16xf32>
    %22 = tpu.matmul %19, %20, %cst_19 {dimension_numbers = #tpu.dot_dimension_numbers<[1], [1], [0], [0], [0, 0, 1, 0], [], []>} : vector<16x8xf32>, vector<16x8xf32>, vector<16x16xf32> -> vector<16x16xf32>
    %23 = arith.addf %22, %18 : vector<16x16xf32>
    %cst_20 = arith.constant dense<0xFF800000> : vector<16xf32>
    %24 = vector.multi_reduction <maximumf>, %23, %cst_20 [1] : vector<16x16xf32> to vector<16xf32>
    %25 = vector.shape_cast %24 : vector<16xf32> to vector<16x1xf32>
    %26 = vector.broadcast %25 : vector<16x1xf32> to vector<16x16xf32>
    %27 = arith.subf %23, %26 : vector<16x16xf32>
    %28 = math.exp %27 : vector<16x16xf32>
    %cst_21 = arith.constant dense<0.000000e+00> : vector<16xf32>
    %29 = vector.multi_reduction <add>, %28, %cst_21 [1] : vector<16x16xf32> to vector<16xf32>
    %30 = vector.shape_cast %29 : vector<16xf32> to vector<16x1xf32>
    %31 = tpu.reciprocal %30 {approx = true} : vector<16x1xf32> -> vector<16x1xf32>
    %32 = vector.broadcast %31 : vector<16x1xf32> to vector<16x16xf32>
    %33 = arith.mulf %28, %32 : vector<16x16xf32>
    %cst_22 = arith.constant dense<0.000000e+00> : vector<16x8xf32>
    %34 = tpu.matmul %33, %21, %cst_22 {dimension_numbers = #tpu.dot_dimension_numbers<[1], [0], [0], [1], [0, 0, 1, 1], [], []>} : vector<16x16xf32>, vector<16x8xf32>, vector<16x8xf32> -> vector<16x8xf32>
    %c0_23 = arith.constant 0 : index
    %c0_24 = arith.constant 0 : index
    %35 = vector.load %arg6[%c0_23, %c0_24] : memref<32x32xf32, #tpu.memory_space<vmem>>, vector<8x32xf32>
    %cst_25 = arith.constant dense<0.000000e+00> : vector<16x32xf32>
    %36 = tpu.matmul %34, %35, %cst_25 {dimension_numbers = #tpu.dot_dimension_numbers<[1], [0], [0], [1], [0, 0, 1, 1], [], []>} : vector<16x8xf32>, vector<8x32xf32>, vector<16x32xf32> -> vector<16x32xf32>
    %37 = vector.extract_strided_slice %5 {offsets = [0, 8], sizes = [16, 8], strides = [1, 1]} : vector<16x32xf32> to vector<16x8xf32>
    %38 = vector.extract_strided_slice %11 {offsets = [0, 8], sizes = [16, 8], strides = [1, 1]} : vector<16x32xf32> to vector<16x8xf32>
    %39 = vector.extract_strided_slice %17 {offsets = [0, 8], sizes = [16, 8], strides = [1, 1]} : vector<16x32xf32> to vector<16x8xf32>
    %cst_26 = arith.constant dense<0.000000e+00> : vector<16x16xf32>
    %40 = tpu.matmul %37, %38, %cst_26 {dimension_numbers = #tpu.dot_dimension_numbers<[1], [1], [0], [0], [0, 0, 1, 0], [], []>} : vector<16x8xf32>, vector<16x8xf32>, vector<16x16xf32> -> vector<16x16xf32>
    %41 = arith.addf %40, %18 : vector<16x16xf32>
    %cst_27 = arith.constant dense<0xFF800000> : vector<16xf32>
    %42 = vector.multi_reduction <maximumf>, %41, %cst_27 [1] : vector<16x16xf32> to vector<16xf32>
    %43 = vector.shape_cast %42 : vector<16xf32> to vector<16x1xf32>
    %44 = vector.broadcast %43 : vector<16x1xf32> to vector<16x16xf32>
    %45 = arith.subf %41, %44 : vector<16x16xf32>
    %46 = math.exp %45 : vector<16x16xf32>
    %cst_28 = arith.constant dense<0.000000e+00> : vector<16xf32>
    %47 = vector.multi_reduction <add>, %46, %cst_28 [1] : vector<16x16xf32> to vector<16xf32>
    %48 = vector.shape_cast %47 : vector<16xf32> to vector<16x1xf32>
    %49 = tpu.reciprocal %48 {approx = true} : vector<16x1xf32> -> vector<16x1xf32>
    %50 = vector.broadcast %49 : vector<16x1xf32> to vector<16x16xf32>
    %51 = arith.mulf %46, %50 : vector<16x16xf32>
    %cst_29 = arith.constant dense<0.000000e+00> : vector<16x8xf32>
    %52 = tpu.matmul %51, %39, %cst_29 {dimension_numbers = #tpu.dot_dimension_numbers<[1], [0], [0], [1], [0, 0, 1, 1], [], []>} : vector<16x16xf32>, vector<16x8xf32>, vector<16x8xf32> -> vector<16x8xf32>
    %c8 = arith.constant 8 : index
    %c0_30 = arith.constant 0 : index
    %53 = vector.load %arg6[%c8, %c0_30] : memref<32x32xf32, #tpu.memory_space<vmem>>, vector<8x32xf32>
    %cst_31 = arith.constant dense<0.000000e+00> : vector<16x32xf32>
    %54 = tpu.matmul %52, %53, %cst_31 {dimension_numbers = #tpu.dot_dimension_numbers<[1], [0], [0], [1], [0, 0, 1, 1], [], []>} : vector<16x8xf32>, vector<8x32xf32>, vector<16x32xf32> -> vector<16x32xf32>
    %55 = arith.addf %36, %54 : vector<16x32xf32>
    %56 = vector.extract_strided_slice %5 {offsets = [0, 16], sizes = [16, 8], strides = [1, 1]} : vector<16x32xf32> to vector<16x8xf32>
    %57 = vector.extract_strided_slice %11 {offsets = [0, 16], sizes = [16, 8], strides = [1, 1]} : vector<16x32xf32> to vector<16x8xf32>
    %58 = vector.extract_strided_slice %17 {offsets = [0, 16], sizes = [16, 8], strides = [1, 1]} : vector<16x32xf32> to vector<16x8xf32>
    %cst_32 = arith.constant dense<0.000000e+00> : vector<16x16xf32>
    %59 = tpu.matmul %56, %57, %cst_32 {dimension_numbers = #tpu.dot_dimension_numbers<[1], [1], [0], [0], [0, 0, 1, 0], [], []>} : vector<16x8xf32>, vector<16x8xf32>, vector<16x16xf32> -> vector<16x16xf32>
    %60 = arith.addf %59, %18 : vector<16x16xf32>
    %cst_33 = arith.constant dense<0xFF800000> : vector<16xf32>
    %61 = vector.multi_reduction <maximumf>, %60, %cst_33 [1] : vector<16x16xf32> to vector<16xf32>
    %62 = vector.shape_cast %61 : vector<16xf32> to vector<16x1xf32>
    %63 = vector.broadcast %62 : vector<16x1xf32> to vector<16x16xf32>
    %64 = arith.subf %60, %63 : vector<16x16xf32>
    %65 = math.exp %64 : vector<16x16xf32>
    %cst_34 = arith.constant dense<0.000000e+00> : vector<16xf32>
    %66 = vector.multi_reduction <add>, %65, %cst_34 [1] : vector<16x16xf32> to vector<16xf32>
    %67 = vector.shape_cast %66 : vector<16xf32> to vector<16x1xf32>
    %68 = tpu.reciprocal %67 {approx = true} : vector<16x1xf32> -> vector<16x1xf32>
    %69 = vector.broadcast %68 : vector<16x1xf32> to vector<16x16xf32>
    %70 = arith.mulf %65, %69 : vector<16x16xf32>
    %cst_35 = arith.constant dense<0.000000e+00> : vector<16x8xf32>
    %71 = tpu.matmul %70, %58, %cst_35 {dimension_numbers = #tpu.dot_dimension_numbers<[1], [0], [0], [1], [0, 0, 1, 1], [], []>} : vector<16x16xf32>, vector<16x8xf32>, vector<16x8xf32> -> vector<16x8xf32>
    %c16 = arith.constant 16 : index
    %c0_36 = arith.constant 0 : index
    %72 = vector.load %arg6[%c16, %c0_36] : memref<32x32xf32, #tpu.memory_space<vmem>>, vector<8x32xf32>
    %cst_37 = arith.constant dense<0.000000e+00> : vector<16x32xf32>
    %73 = tpu.matmul %71, %72, %cst_37 {dimension_numbers = #tpu.dot_dimension_numbers<[1], [0], [0], [1], [0, 0, 1, 1], [], []>} : vector<16x8xf32>, vector<8x32xf32>, vector<16x32xf32> -> vector<16x32xf32>
    %74 = arith.addf %55, %73 : vector<16x32xf32>
    %75 = vector.extract_strided_slice %5 {offsets = [0, 24], sizes = [16, 8], strides = [1, 1]} : vector<16x32xf32> to vector<16x8xf32>
    %76 = vector.extract_strided_slice %11 {offsets = [0, 24], sizes = [16, 8], strides = [1, 1]} : vector<16x32xf32> to vector<16x8xf32>
    %77 = vector.extract_strided_slice %17 {offsets = [0, 24], sizes = [16, 8], strides = [1, 1]} : vector<16x32xf32> to vector<16x8xf32>
    %cst_38 = arith.constant dense<0.000000e+00> : vector<16x16xf32>
    %78 = tpu.matmul %75, %76, %cst_38 {dimension_numbers = #tpu.dot_dimension_numbers<[1], [1], [0], [0], [0, 0, 1, 0], [], []>} : vector<16x8xf32>, vector<16x8xf32>, vector<16x16xf32> -> vector<16x16xf32>
    %79 = arith.addf %78, %18 : vector<16x16xf32>
    %cst_39 = arith.constant dense<0xFF800000> : vector<16xf32>
    %80 = vector.multi_reduction <maximumf>, %79, %cst_39 [1] : vector<16x16xf32> to vector<16xf32>
    %81 = vector.shape_cast %80 : vector<16xf32> to vector<16x1xf32>
    %82 = vector.broadcast %81 : vector<16x1xf32> to vector<16x16xf32>
    %83 = arith.subf %79, %82 : vector<16x16xf32>
    %84 = math.exp %83 : vector<16x16xf32>
    %cst_40 = arith.constant dense<0.000000e+00> : vector<16xf32>
    %85 = vector.multi_reduction <add>, %84, %cst_40 [1] : vector<16x16xf32> to vector<16xf32>
    %86 = vector.shape_cast %85 : vector<16xf32> to vector<16x1xf32>
    %87 = tpu.reciprocal %86 {approx = true} : vector<16x1xf32> -> vector<16x1xf32>
    %88 = vector.broadcast %87 : vector<16x1xf32> to vector<16x16xf32>
    %89 = arith.mulf %84, %88 : vector<16x16xf32>
    %cst_41 = arith.constant dense<0.000000e+00> : vector<16x8xf32>
    %90 = tpu.matmul %89, %77, %cst_41 {dimension_numbers = #tpu.dot_dimension_numbers<[1], [0], [0], [1], [0, 0, 1, 1], [], []>} : vector<16x16xf32>, vector<16x8xf32>, vector<16x8xf32> -> vector<16x8xf32>
    %c24 = arith.constant 24 : index
    %c0_42 = arith.constant 0 : index
    %91 = vector.load %arg6[%c24, %c0_42] : memref<32x32xf32, #tpu.memory_space<vmem>>, vector<8x32xf32>
    %cst_43 = arith.constant dense<0.000000e+00> : vector<16x32xf32>
    %92 = tpu.matmul %90, %91, %cst_43 {dimension_numbers = #tpu.dot_dimension_numbers<[1], [0], [0], [1], [0, 0, 1, 1], [], []>} : vector<16x8xf32>, vector<8x32xf32>, vector<16x32xf32> -> vector<16x32xf32>
    %93 = arith.addf %74, %92 : vector<16x32xf32>
    %c0_44 = arith.constant 0 : index
    %c0_45 = arith.constant 0 : index
    %94 = vector.load %arg7[%c0_44, %c0_45] : memref<1x32xf32, #tpu.memory_space<vmem>>, vector<1x32xf32>
    %95 = vector.broadcast %94 : vector<1x32xf32> to vector<16x32xf32>
    %96 = arith.addf %93, %95 : vector<16x32xf32>
    %c0_46 = arith.constant 0 : index
    %c0_47 = arith.constant 0 : index
    %97 = vector.load %arg8[%c0_46, %c0_47] : memref<16x32xf32, #tpu.memory_space<vmem>>, vector<16x32xf32>
    tpu.vector_store %arg8[%c0_46, %c0_47], %96 {strides = array<i32>} : memref<16x32xf32, #tpu.memory_space<vmem>>, vector<16x32xf32>,
    return
  }
}

</mosaic_0001>

<llo_original>
// kernel: mhatt_forward.1
$region0: #{mhatt_forward.1}
  #allocation0 [shape = 'u32[]', space=smem, size = 0x4, offset = 0x4, fixed_abs, tag = 'smem constant byte address 0x4 - core index']
  #allocation1 [shape = 'u32[144,128]{1,0:T(1,128)}', space=vmem, size = 0x12000, scoped, tag = 'internal scratch']
  %s0 = inlined_call_operand.vmem [shape: f32[16,32], index: 0, kind: input, shape index: {}]
  %s1 = inlined_call_operand.vmem [shape: f32[16,32], index: 1, kind: input, shape index: {}]
  %s2 = inlined_call_operand.vmem [shape: f32[16,32], index: 2, kind: input, shape index: {}]
  %s3 = inlined_call_operand.vmem [shape: f32[16,16], index: 3, kind: input, shape index: {}]
  %s4 = inlined_call_operand.vmem [shape: f32[32,96], index: 4, kind: input, shape index: {}]
  %s5 = inlined_call_operand.vmem [shape: f32[1,96], index: 5, kind: input, shape index: {}]
  %s6 = inlined_call_operand.vmem [shape: f32[32,32], index: 6, kind: input, shape index: {}]
  %s7 = inlined_call_operand.vmem [shape: f32[1,32], index: 7, kind: input, shape index: {}]
  %s8 = inlined_call_operand.hbm [shape: f32[16,32], index: 8, kind: output, shape index: {}]
  %s9 = sld [smem:[#allocation0]]
  $region42: #{mhatt_forward.1} parent=0
    _
  %s11 = ssub.s32 1, %s9
  %s12 = scalar_select 0, %s11, %s9
  $region1: #{mhatt_forward.1} parent=0
    #allocation2 [shape = 'u8[8192]{0}', space=vmem, size = 0x2000, scoped, tag = 'output window, operand 0, single buffered']
    #allocation3 [shape = 's32[1]{0}', space=sflag, size = 0x4, scoped, tag = 'scoped memory for mhatt_forward.1']
    %13 = vsyncpa [#allocation3], 0
    // Predicated region
    $region2: #{mhatt_forward.1} parent=1 // pred_check
      _
    $region3: #{mhatt_forward.1} parent=1 // pred_check_branch
      %15 = sbr.rel (0) target = $region5
    $region4: #{mhatt_forward.1} parent=1 // pred_region
      _
    $region5: #{mhatt_forward.1} parent=1 // pred_fallthru
      _
    // Predicated region
    $region6: #{mhatt_forward.1} parent=1 // pred_check
      _
    $region7: #{mhatt_forward.1} parent=1 // pred_check_branch
      %17 = sbr.rel (0) target = $region9
    $region8: #{mhatt_forward.1} parent=1 // pred_region
      _
    $region9: #{mhatt_forward.1} parent=1 // pred_fallthru
      _
    // Predicated region
    $region10: #{mhatt_forward.1} parent=1 // pred_check
      _
    $region11: #{mhatt_forward.1} parent=1 // pred_check_branch
      %19 = sbr.rel (0) target = $region13
    $region12: #{mhatt_forward.1} parent=1 // pred_region
      _
    $region13: #{mhatt_forward.1} parent=1 // pred_fallthru
      _
    // Predicated region
    $region14: #{mhatt_forward.1} parent=1 // pred_check
      _
    $region15: #{mhatt_forward.1} parent=1 // pred_check_branch
      %21 = sbr.rel (0) target = $region17
    $region16: #{mhatt_forward.1} parent=1 // pred_region
      _
    $region17: #{mhatt_forward.1} parent=1 // pred_fallthru
      _
    // Predicated region
    $region18: #{mhatt_forward.1} parent=1 // pred_check
      _
    $region19: #{mhatt_forward.1} parent=1 // pred_check_branch
      %23 = sbr.rel (0) target = $region21
    $region20: #{mhatt_forward.1} parent=1 // pred_region
      _
    $region21: #{mhatt_forward.1} parent=1 // pred_fallthru
      _
    // Predicated region
    $region22: #{mhatt_forward.1} parent=1 // pred_check
      _
    $region23: #{mhatt_forward.1} parent=1 // pred_check_branch
      %25 = sbr.rel (0) target = $region25
    $region24: #{mhatt_forward.1} parent=1 // pred_region
      _
    $region25: #{mhatt_forward.1} parent=1 // pred_fallthru
      _
    // Predicated region
    $region26: #{mhatt_forward.1} parent=1 // pred_check
      _
    $region27: #{mhatt_forward.1} parent=1 // pred_check_branch
      %27 = sbr.rel (0) target = $region29
    $region28: #{mhatt_forward.1} parent=1 // pred_region
      _
    $region29: #{mhatt_forward.1} parent=1 // pred_fallthru
      _
    // Predicated region
    $region30: #{mhatt_forward.1} parent=1 // pred_check
      _
    $region31: #{mhatt_forward.1} parent=1 // pred_check_branch
      %29 = sbr.rel (0) target = $region33
    $region32: #{mhatt_forward.1} parent=1 // pred_region
      _
    $region33: #{mhatt_forward.1} parent=1 // pred_fallthru
      _
    %v30 = vld [vmem:[%s0] sm:$0xff]
    %v31 = vld [vmem:[%s0 + $0x8] sm:$0xff]
    %v32 = vld [vmem:[%s4] sm:$0xff]
    %v33 = vld [vmem:[%s4 + $0x8] sm:$0xff]
    %v34 = vld [vmem:[%s4 + $0x10] sm:$0xff]
    %v35 = vld [vmem:[%s4 + $0x18] sm:$0xff]
    %v36 = vld [vmem:[%s5] sm:$0x1]
    %v38 = vlaneseq
    %v39 = vshrl.u32 %v38, 7
    %v40 = vsub.s32 0, %v39
    %v41 = vrot.slane %v36, %v40
    %vm43 = vcmask 261120
    %v45 = vsel %vm43, %v30, 0
    %v48 = vsel %vm43, %v31, 0
    %50 = vmatprep.subr.mxu0 0.0
    %51 = vmatpush1.msra.mxu0 %v32
    %52 = vmatprep.subr.mxu0 0.0
    %53 = vmatpush1.msra.mxu0 %v33
    %54 = vmatprep.subr.mxu0 0.0
    %55 = vmatpush1.msra.mxu0 %v34
    %56 = vmatprep.subr.mxu0 0.0
    %57 = vmatpush1.msra.mxu0 %v35
    %58 = vmatprep.subr.mxu0 0.0
    %59 = vmatpush1.msra.mxu0 0.0
    %60 = vmatprep.subr.mxu0 0.0
    %61 = vmatpush1.msra.mxu0 0.0
    %62 = vmatprep.subr.mxu0 0.0
    %63 = vmatpush1.msra.mxu0 0.0
    %64 = vmatprep.subr.mxu0 0.0
    %65 = vmatpush1.msra.mxu0 0.0
    %66 = vmatprep.subr.mxu0 0.0
    %67 = vmatpush1.msra.mxu0 0.0
    %68 = vmatprep.subr.mxu0 0.0
    %69 = vmatpush1.msra.mxu0 0.0
    %70 = vmatprep.subr.mxu0 0.0
    %71 = vmatpush1.msra.mxu0 0.0
    %72 = vmatprep.subr.mxu0 0.0
    %73 = vmatpush1.msra.mxu0 0.0
    %74 = vmatprep.subr.mxu0 0.0
    %75 = vmatpush1.msra.mxu0 0.0
    %76 = vmatprep.subr.mxu0 0.0
    %77 = vmatpush1.msra.mxu0 0.0
    %78 = vmatprep.subr.mxu0 0.0
    %79 = vmatpush1.msra.mxu0 0.0
    %80 = vmatprep.subr.mxu0 0.0
    %81 = vmatpush1.msra.mxu0 0.0
    %82 = vmatprep.subr.mxu0 0.0
    %83 = vmatpush1.msra.mxu0 0.0
    %84 = vmatprep.subr.mxu0 0.0
    %85 = vmatpush1.msra.mxu0 0.0
    %86 = vmatprep.subr.mxu0 0.0
    %87 = vmatpush1.msra.mxu0 0.0
    %88 = vmatprep.subr.mxu0 0.0
    %89 = vmatpush1.msra.mxu0 0.0
    %90 = vmatprep.subr.mxu0 0.0
    %91 = vmatpush1.msra.mxu0 0.0
    %92 = vmatprep.subr.mxu0 0.0
    %93 = vmatpush1.msra.mxu0 0.0
    %94 = vmatprep.subr.mxu0 0.0
    %95 = vmatpush1.msra.mxu0 0.0
    %96 = vmatprep.subr.mxu0 0.0
    %97 = vmatpush1.msra.mxu0 0.0
    %98 = vmatprep.subr.mxu0 0.0
    %99 = vmatpush1.msra.mxu0 0.0
    %100 = vmatprep.subr.mxu0 0.0
    %101 = vmatpush1.msra.mxu0 0.0
    %102 = vmatprep.subr.mxu0 0.0
    %103 = vmatpush1.msra.mxu0 0.0
    %104 = vmatprep.subr.mxu0 0.0
    %105 = vmatpush1.msra.mxu0 0.0
    %106 = vmatprep.subr.mxu0 0.0
    %107 = vmatpush1.msra.mxu0 0.0
    %108 = vmatprep.subr.mxu0 0.0
    %109 = vmatpush1.msra.mxu0 0.0
    %110 = vmatprep.subr.mxu0 0.0
    %111 = vmatpush1.msra.mxu0 0.0
    %112 = vmatprep.subr.mxu0 0.0
    %113 = vmatpush1.msra.mxu0 0.0
    %114 = vmatprep.mubr.f32.mxu0 0.0
    %115 = vmatmul.mubr.f32.gmra.mrb[0].mxu0 %v45
    %v116 = vpop.f32.mrb[0].mxu0
    %v117 = vadd.f32 %v41, %v116
    %v118 = vpop.f32.mrb[0].mxu0
    %119 = vmatprep.mubr.f32.mxu0 0.0
    %120 = vmatmul.mubr.f32.gmra.mrb[0].mxu0 %v48
    %v121 = vpop.f32.mrb[0].mxu0
    %v122 = vadd.f32 %v41, %v121
    %v123 = vpop.f32.mrb[0].mxu0
    %124 = vdwg.mxu0
    %v125 = vld [vmem:[%s1] sm:$0xff]
    %v126 = vld [vmem:[%s1 + $0x8] sm:$0xff]
    %131 = vrot.lane.b32.xlu0 %v32, 96
    %v132 = vpop.permute.xlu0 %131
    %133 = vrot.lane.b32.xlu0 %v33, 96
    %v134 = vpop.permute.xlu0 %133
    %135 = vrot.lane.b32.xlu0 %v34, 96
    %v136 = vpop.permute.xlu0 %135
    %137 = vrot.lane.b32.xlu0 %v35, 96
    %v138 = vpop.permute.xlu0 %137
    %143 = vrot.lane.b32.xlu0 %v41, 96
    %v144 = vpop.permute.xlu0 %143
    %v147 = vsel %vm43, %v125, 0
    %v150 = vsel %vm43, %v126, 0
    %152 = vmatprep.subr.mxu0 0.0
    %153 = vmatpush1.msra.mxu0 %v132
    %154 = vmatprep.subr.mxu0 0.0
    %155 = vmatpush1.msra.mxu0 %v134
    %156 = vmatprep.subr.mxu0 0.0
    %157 = vmatpush1.msra.mxu0 %v136
    %158 = vmatprep.subr.mxu0 0.0
    %159 = vmatpush1.msra.mxu0 %v138
    %160 = vmatprep.subr.mxu0 0.0
    %161 = vmatpush1.msra.mxu0 0.0
    %162 = vmatprep.subr.mxu0 0.0
    %163 = vmatpush1.msra.mxu0 0.0
    %164 = vmatprep.subr.mxu0 0.0
    %165 = vmatpush1.msra.mxu0 0.0
    %166 = vmatprep.subr.mxu0 0.0
    %167 = vmatpush1.msra.mxu0 0.0
    %168 = vmatprep.subr.mxu0 0.0
    %169 = vmatpush1.msra.mxu0 0.0
    %170 = vmatprep.subr.mxu0 0.0
    %171 = vmatpush1.msra.mxu0 0.0
    %172 = vmatprep.subr.mxu0 0.0
    %173 = vmatpush1.msra.mxu0 0.0
    %174 = vmatprep.subr.mxu0 0.0
    %175 = vmatpush1.msra.mxu0 0.0
    %176 = vmatprep.subr.mxu0 0.0
    %177 = vmatpush1.msra.mxu0 0.0
    %178 = vmatprep.subr.mxu0 0.0
    %179 = vmatpush1.msra.mxu0 0.0
    %180 = vmatprep.subr.mxu0 0.0
    %181 = vmatpush1.msra.mxu0 0.0
    %182 = vmatprep.subr.mxu0 0.0
    %183 = vmatpush1.msra.mxu0 0.0
    %184 = vmatprep.subr.mxu0 0.0
    %185 = vmatpush1.msra.mxu0 0.0
    %186 = vmatprep.subr.mxu0 0.0
    %187 = vmatpush1.msra.mxu0 0.0
    %188 = vmatprep.subr.mxu0 0.0
    %189 = vmatpush1.msra.mxu0 0.0
    %190 = vmatprep.subr.mxu0 0.0
    %191 = vmatpush1.msra.mxu0 0.0
    %192 = vmatprep.subr.mxu0 0.0
    %193 = vmatpush1.msra.mxu0 0.0
    %194 = vmatprep.subr.mxu0 0.0
    %195 = vmatpush1.msra.mxu0 0.0
    %196 = vmatprep.subr.mxu0 0.0
    %197 = vmatpush1.msra.mxu0 0.0
    %198 = vmatprep.subr.mxu0 0.0
    %199 = vmatpush1.msra.mxu0 0.0
    %200 = vmatprep.subr.mxu0 0.0
    %201 = vmatpush1.msra.mxu0 0.0
    %202 = vmatprep.subr.mxu0 0.0
    %203 = vmatpush1.msra.mxu0 0.0
    %204 = vmatprep.subr.mxu0 0.0
    %205 = vmatpush1.msra.mxu0 0.0
    %206 = vmatprep.subr.mxu0 0.0
    %207 = vmatpush1.msra.mxu0 0.0
    %208 = vmatprep.subr.mxu0 0.0
    %209 = vmatpush1.msra.mxu0 0.0
    %210 = vmatprep.subr.mxu0 0.0
    %211 = vmatpush1.msra.mxu0 0.0
    %212 = vmatprep.subr.mxu0 0.0
    %213 = vmatpush1.msra.mxu0 0.0
    %214 = vmatprep.subr.mxu0 0.0
    %215 = vmatpush1.msra.mxu0 0.0
    %216 = vmatprep.mubr.f32.mxu0 0.0
    %217 = vmatmul.mubr.f32.gmra.mrb[0].mxu0 %v147
    %v218 = vpop.f32.mrb[0].mxu0
    %v219 = vadd.f32 %v144, %v218
    %v220 = vpop.f32.mrb[0].mxu0
    %221 = vmatprep.mubr.f32.mxu0 0.0
    %222 = vmatmul.mubr.f32.gmra.mrb[0].mxu0 %v150
    %v223 = vpop.f32.mrb[0].mxu0
    %v224 = vadd.f32 %v144, %v223
    %v225 = vpop.f32.mrb[0].mxu0
    %226 = vdwg.mxu0
    %v227 = vld [vmem:[%s2] sm:$0xff]
    %v228 = vld [vmem:[%s2 + $0x8] sm:$0xff]
    %229 = vrot.lane.b32.xlu0 %v32, 64
    %v230 = vpop.permute.xlu0 %229
    %231 = vrot.lane.b32.xlu0 %v33, 64
    %v232 = vpop.permute.xlu0 %231
    %233 = vrot.lane.b32.xlu0 %v34, 64
    %v234 = vpop.permute.xlu0 %233
    %235 = vrot.lane.b32.xlu0 %v35, 64
    %v236 = vpop.permute.xlu0 %235
    %241 = vrot.lane.b32.xlu0 %v41, 64
    %v242 = vpop.permute.xlu0 %241
    %v245 = vsel %vm43, %v227, 0
    %v248 = vsel %vm43, %v228, 0
    %250 = vmatprep.subr.mxu0 0.0
    %251 = vmatpush1.msra.mxu0 %v230
    %252 = vmatprep.subr.mxu0 0.0
    %253 = vmatpush1.msra.mxu0 %v232
    %254 = vmatprep.subr.mxu0 0.0
    %255 = vmatpush1.msra.mxu0 %v234
    %256 = vmatprep.subr.mxu0 0.0
    %257 = vmatpush1.msra.mxu0 %v236
    %258 = vmatprep.subr.mxu0 0.0
    %259 = vmatpush1.msra.mxu0 0.0
    %260 = vmatprep.subr.mxu0 0.0
    %261 = vmatpush1.msra.mxu0 0.0
    %262 = vmatprep.subr.mxu0 0.0
    %263 = vmatpush1.msra.mxu0 0.0
    %264 = vmatprep.subr.mxu0 0.0
    %265 = vmatpush1.msra.mxu0 0.0
    %266 = vmatprep.subr.mxu0 0.0
    %267 = vmatpush1.msra.mxu0 0.0
    %268 = vmatprep.subr.mxu0 0.0
    %269 = vmatpush1.msra.mxu0 0.0
    %270 = vmatprep.subr.mxu0 0.0
    %271 = vmatpush1.msra.mxu0 0.0
    %272 = vmatprep.subr.mxu0 0.0
    %273 = vmatpush1.msra.mxu0 0.0
    %274 = vmatprep.subr.mxu0 0.0
    %275 = vmatpush1.msra.mxu0 0.0
    %276 = vmatprep.subr.mxu0 0.0
    %277 = vmatpush1.msra.mxu0 0.0
    %278 = vmatprep.subr.mxu0 0.0
    %279 = vmatpush1.msra.mxu0 0.0
    %280 = vmatprep.subr.mxu0 0.0
    %281 = vmatpush1.msra.mxu0 0.0
    %282 = vmatprep.subr.mxu0 0.0
    %283 = vmatpush1.msra.mxu0 0.0
    %284 = vmatprep.subr.mxu0 0.0
    %285 = vmatpush1.msra.mxu0 0.0
    %286 = vmatprep.subr.mxu0 0.0
    %287 = vmatpush1.msra.mxu0 0.0
    %288 = vmatprep.subr.mxu0 0.0
    %289 = vmatpush1.msra.mxu0 0.0
    %290 = vmatprep.subr.mxu0 0.0
    %291 = vmatpush1.msra.mxu0 0.0
    %292 = vmatprep.subr.mxu0 0.0
    %293 = vmatpush1.msra.mxu0 0.0
    %294 = vmatprep.subr.mxu0 0.0
    %295 = vmatpush1.msra.mxu0 0.0
    %296 = vmatprep.subr.mxu0 0.0
    %297 = vmatpush1.msra.mxu0 0.0
    %298 = vmatprep.subr.mxu0 0.0
    %299 = vmatpush1.msra.mxu0 0.0
    %300 = vmatprep.subr.mxu0 0.0
    %301 = vmatpush1.msra.mxu0 0.0
    %302 = vmatprep.subr.mxu0 0.0
    %303 = vmatpush1.msra.mxu0 0.0
    %304 = vmatprep.subr.mxu0 0.0
    %305 = vmatpush1.msra.mxu0 0.0
    %306 = vmatprep.subr.mxu0 0.0
    %307 = vmatpush1.msra.mxu0 0.0
    %308 = vmatprep.subr.mxu0 0.0
    %309 = vmatpush1.msra.mxu0 0.0
    %310 = vmatprep.subr.mxu0 0.0
    %311 = vmatpush1.msra.mxu0 0.0
    %312 = vmatprep.subr.mxu0 0.0
    %313 = vmatpush1.msra.mxu0 0.0
    %314 = vmatprep.mubr.f32.mxu0 0.0
    %315 = vmatmul.mubr.f32.gmra.mrb[0].mxu0 %v245
    %v316 = vpop.f32.mrb[0].mxu0
    %v317 = vadd.f32 %v242, %v316
    %v318 = vpop.f32.mrb[0].mxu0
    %319 = vmatprep.mubr.f32.mxu0 0.0
    %320 = vmatmul.mubr.f32.gmra.mrb[0].mxu0 %v248
    %v321 = vpop.f32.mrb[0].mxu0
    %v322 = vadd.f32 %v242, %v321
    %v323 = vpop.f32.mrb[0].mxu0
    %324 = vdwg.mxu0
    %v325 = vld [vmem:[%s3] sm:$0xff]
    %v326 = vld [vmem:[%s3 + $0x8] sm:$0xff]
    %vm327 = vcmask 64512
    %v329 = vsel %vm327, %v117, 0
    %v332 = vsel %vm327, %v122, 0
    %v335 = vsel %vm327, %v219, 0
    %v338 = vsel %vm327, %v224, 0
    %340 = vmatprep.subr.mxu0 0.0
    %341 = vmatpush1.xpose.msra.mxu0 %v335
    %342 = vmatprep.subr.mxu0 0.0
    %343 = vmatpush1.xpose.msra.mxu0 %v338
    %344 = vmatprep.subr.mxu0 0.0
    %345 = vmatpush1.xpose.msra.mxu0 0.0
    %346 = vmatprep.subr.mxu0 0.0
    %347 = vmatpush1.xpose.msra.mxu0 0.0
    %348 = vmatprep.subr.mxu0 0.0
    %349 = vmatpush1.xpose.msra.mxu0 0.0
    %350 = vmatprep.subr.mxu0 0.0
    %351 = vmatpush1.xpose.msra.mxu0 0.0
    %352 = vmatprep.subr.mxu0 0.0
    %353 = vmatpush1.xpose.msra.mxu0 0.0
    %354 = vmatprep.subr.mxu0 0.0
    %355 = vmatpush1.xpose.msra.mxu0 0.0
    %356 = vmatprep.subr.mxu0 0.0
    %357 = vmatpush1.xpose.msra.mxu0 0.0
    %358 = vmatprep.subr.mxu0 0.0
    %359 = vmatpush1.xpose.msra.mxu0 0.0
    %360 = vmatprep.subr.mxu0 0.0
    %361 = vmatpush1.xpose.msra.mxu0 0.0
    %362 = vmatprep.subr.mxu0 0.0
    %363 = vmatpush1.xpose.msra.mxu0 0.0
    %364 = vmatprep.subr.mxu0 0.0
    %365 = vmatpush1.xpose.msra.mxu0 0.0
    %366 = vmatprep.subr.mxu0 0.0
    %367 = vmatpush1.xpose.msra.mxu0 0.0
    %368 = vmatprep.subr.mxu0 0.0
    %369 = vmatpush1.xpose.msra.mxu0 0.0
    %370 = vmatprep.subr.mxu0 0.0
    %371 = vmatpush1.xpose.msra.mxu0 0.0
    %372 = vmatprep.subr.mxu0 0.0
    %373 = vmatpush1.xpose.msra.mxu0 0.0
    %374 = vmatprep.subr.mxu0 0.0
    %375 = vmatpush1.xpose.msra.mxu0 0.0
    %376 = vmatprep.subr.mxu0 0.0
    %377 = vmatpush1.xpose.msra.mxu0 0.0
    %378 = vmatprep.subr.mxu0 0.0
    %379 = vmatpush1.xpose.msra.mxu0 0.0
    %380 = vmatprep.subr.mxu0 0.0
    %381 = vmatpush1.xpose.msra.mxu0 0.0
    %382 = vmatprep.subr.mxu0 0.0
    %383 = vmatpush1.xpose.msra.mxu0 0.0
    %384 = vmatprep.subr.mxu0 0.0
    %385 = vmatpush1.xpose.msra.mxu0 0.0
    %386 = vmatprep.subr.mxu0 0.0
    %387 = vmatpush1.xpose.msra.mxu0 0.0
    %388 = vmatprep.subr.mxu0 0.0
    %389 = vmatpush1.xpose.msra.mxu0 0.0
    %390 = vmatprep.subr.mxu0 0.0
    %391 = vmatpush1.xpose.msra.mxu0 0.0
    %392 = vmatprep.subr.mxu0 0.0
    %393 = vmatpush1.xpose.msra.mxu0 0.0
    %394 = vmatprep.subr.mxu0 0.0
    %395 = vmatpush1.xpose.msra.mxu0 0.0
    %396 = vmatprep.subr.mxu0 0.0
    %397 = vmatpush1.xpose.msra.mxu0 0.0
    %398 = vmatprep.subr.mxu0 0.0
    %399 = vmatpush1.xpose.msra.mxu0 0.0
    %400 = vmatprep.subr.mxu0 0.0
    %401 = vmatpush1.xpose.msra.mxu0 0.0
    %402 = vmatprep.subr.mxu0 0.0
    %403 = vmatpush1.xpose.msra.mxu0 0.0
    %404 = vmatprep.mubr.f32.mxu0 0.0
    %405 = vmatmul.mubr.f32.gmra.mrb[0].mxu0 %v329
    %v406 = vpop.f32.mrb[0].mxu0
    %v407 = vadd.f32 %v325, %v406
    %v408 = vpop.f32.mrb[0].mxu0
    %409 = vmatprep.mubr.f32.mxu0 0.0
    %410 = vmatmul.mubr.f32.gmra.mrb[0].mxu0 %v332
    %v411 = vpop.f32.mrb[0].mxu0
    %v412 = vadd.f32 %v326, %v411
    %v413 = vpop.f32.mrb[0].mxu0
    %414 = vdwg.mxu0
    %vm415 = vcmask 130048
    %v416 = vsel %vm415, %v407, -inf
    %417 = vmax.xlane.f32.xlu0 %v416
    %v418 = vpop.xlane.xlu0 %417
    %v419 = vsel %vm415, %v412, -inf
    %420 = vmax.xlane.f32.xlu0 %v419
    %v421 = vpop.xlane.xlu0 %420
    %v422 = vsub.f32 %v407, %v418
    %v423 = vsub.f32 %v412, %v421
    %v424 = vmul.f32 %v422, 1.442695
    %v425 = vpow.pop %v424
    %v426 = vmul.f32 %v423, 1.442695
    %v427 = vpow.pop %v426
    %v428 = vsel %vm415, %v425, 0.0
    %429 = vadd.xlane.f32.xlu0 %v428
    %v430 = vpop.xlane.xlu0 %429
    %v431 = vsel %vm415, %v427, 0.0
    %432 = vadd.xlane.f32.xlu0 %v431
    %v433 = vpop.xlane.xlu0 %432
    %v434 = vrcp.pop %v430
    %v435 = vrcp.pop %v433
    %v436 = vmul.f32 %v425, %v434
    %v437 = vmul.f32 %v427, %v435
    %v439 = vsel %vm415, %v436, 0
    %v442 = vsel %vm415, %v437, 0
    %444 = vmatprep.subr.mxu0 0.0
    %445 = vmatpush1.msra.mxu0 %v317
    %446 = vmatprep.subr.mxu0 0.0
    %447 = vmatpush1.msra.mxu0 %v322
    %448 = vmatprep.subr.mxu0 0.0
    %449 = vmatpush1.msra.mxu0 0.0
    %450 = vmatprep.subr.mxu0 0.0
    %451 = vmatpush1.msra.mxu0 0.0
    %452 = vmatprep.subr.mxu0 0.0
    %453 = vmatpush1.msra.mxu0 0.0
    %454 = vmatprep.subr.mxu0 0.0
    %455 = vmatpush1.msra.mxu0 0.0
    %456 = vmatprep.subr.mxu0 0.0
    %457 = vmatpush1.msra.mxu0 0.0
    %458 = vmatprep.subr.mxu0 0.0
    %459 = vmatpush1.msra.mxu0 0.0
    %460 = vmatprep.subr.mxu0 0.0
    %461 = vmatpush1.msra.mxu0 0.0
    %462 = vmatprep.subr.mxu0 0.0
    %463 = vmatpush1.msra.mxu0 0.0
    %464 = vmatprep.subr.mxu0 0.0
    %465 = vmatpush1.msra.mxu0 0.0
    %466 = vmatprep.subr.mxu0 0.0
    %467 = vmatpush1.msra.mxu0 0.0
    %468 = vmatprep.subr.mxu0 0.0
    %469 = vmatpush1.msra.mxu0 0.0
    %470 = vmatprep.subr.mxu0 0.0
    %471 = vmatpush1.msra.mxu0 0.0
    %472 = vmatprep.subr.mxu0 0.0
    %473 = vmatpush1.msra.mxu0 0.0
    %474 = vmatprep.subr.mxu0 0.0
    %475 = vmatpush1.msra.mxu0 0.0
    %476 = vmatprep.subr.mxu0 0.0
    %477 = vmatpush1.msra.mxu0 0.0
    %478 = vmatprep.subr.mxu0 0.0
    %479 = vmatpush1.msra.mxu0 0.0
    %480 = vmatprep.subr.mxu0 0.0
    %481 = vmatpush1.msra.mxu0 0.0
    %482 = vmatprep.subr.mxu0 0.0
    %483 = vmatpush1.msra.mxu0 0.0
    %484 = vmatprep.subr.mxu0 0.0
    %485 = vmatpush1.msra.mxu0 0.0
    %486 = vmatprep.subr.mxu0 0.0
    %487 = vmatpush1.msra.mxu0 0.0
    %488 = vmatprep.subr.mxu0 0.0
    %489 = vmatpush1.msra.mxu0 0.0
    %490 = vmatprep.subr.mxu0 0.0
    %491 = vmatpush1.msra.mxu0 0.0
    %492 = vmatprep.subr.mxu0 0.0
    %493 = vmatpush1.msra.mxu0 0.0
    %494 = vmatprep.subr.mxu0 0.0
    %495 = vmatpush1.msra.mxu0 0.0
    %496 = vmatprep.subr.mxu0 0.0
    %497 = vmatpush1.msra.mxu0 0.0
    %498 = vmatprep.subr.mxu0 0.0
    %499 = vmatpush1.msra.mxu0 0.0
    %500 = vmatprep.subr.mxu0 0.0
    %501 = vmatpush1.msra.mxu0 0.0
    %502 = vmatprep.subr.mxu0 0.0
    %503 = vmatpush1.msra.mxu0 0.0
    %504 = vmatprep.subr.mxu0 0.0
    %505 = vmatpush1.msra.mxu0 0.0
    %506 = vmatprep.subr.mxu0 0.0
    %507 = vmatpush1.msra.mxu0 0.0
    %508 = vmatprep.mubr.f32.mxu0 0.0
    %509 = vmatmul.mubr.f32.gmra.mrb[0].mxu0 %v439
    %v510 = vpop.f32.mrb[0].mxu0
    %v511 = vadd.f32 0.0, %v510
    %v512 = vpop.f32.mrb[0].mxu0
    %513 = vmatprep.mubr.f32.mxu0 0.0
    %514 = vmatmul.mubr.f32.gmra.mrb[0].mxu0 %v442
    %v515 = vpop.f32.mrb[0].mxu0
    %v516 = vadd.f32 0.0, %v515
    %v517 = vpop.f32.mrb[0].mxu0
    %518 = vdwg.mxu0
    %v519 = vld [vmem:[%s6] sm:$0xff]
    %520 = vrot.lane.b32.xlu0 %v117, 120
    %v521 = vpop.permute.xlu0 %520
    %522 = vrot.lane.b32.xlu0 %v122, 120
    %v523 = vpop.permute.xlu0 %522
    %524 = vrot.lane.b32.xlu0 %v219, 120
    %v525 = vpop.permute.xlu0 %524
    %526 = vrot.lane.b32.xlu0 %v224, 120
    %v527 = vpop.permute.xlu0 %526
    %v528 = vsel %vm327, %v521, 0
    %v530 = vsel %vm327, %v523, 0
    %v532 = vsel %vm327, %v525, 0
    %v534 = vsel %vm327, %v527, 0
    %536 = vmatprep.subr.mxu0 0.0
    %537 = vmatpush1.xpose.msra.mxu0 %v532
    %538 = vmatprep.subr.mxu0 0.0
    %539 = vmatpush1.xpose.msra.mxu0 %v534
    %540 = vmatprep.subr.mxu0 0.0
    %541 = vmatpush1.xpose.msra.mxu0 0.0
    %542 = vmatprep.subr.mxu0 0.0
    %543 = vmatpush1.xpose.msra.mxu0 0.0
    %544 = vmatprep.subr.mxu0 0.0
    %545 = vmatpush1.xpose.msra.mxu0 0.0
    %546 = vmatprep.subr.mxu0 0.0
    %547 = vmatpush1.xpose.msra.mxu0 0.0
    %548 = vmatprep.subr.mxu0 0.0
    %549 = vmatpush1.xpose.msra.mxu0 0.0
    %550 = vmatprep.subr.mxu0 0.0
    %551 = vmatpush1.xpose.msra.mxu0 0.0
    %552 = vmatprep.subr.mxu0 0.0
    %553 = vmatpush1.xpose.msra.mxu0 0.0
    %554 = vmatprep.subr.mxu0 0.0
    %555 = vmatpush1.xpose.msra.mxu0 0.0
    %556 = vmatprep.subr.mxu0 0.0
    %557 = vmatpush1.xpose.msra.mxu0 0.0
    %558 = vmatprep.subr.mxu0 0.0
    %559 = vmatpush1.xpose.msra.mxu0 0.0
    %560 = vmatprep.subr.mxu0 0.0
    %561 = vmatpush1.xpose.msra.mxu0 0.0
    %562 = vmatprep.subr.mxu0 0.0
    %563 = vmatpush1.xpose.msra.mxu0 0.0
    %564 = vmatprep.subr.mxu0 0.0
    %565 = vmatpush1.xpose.msra.mxu0 0.0
    %566 = vmatprep.subr.mxu0 0.0
    %567 = vmatpush1.xpose.msra.mxu0 0.0
    %568 = vmatprep.subr.mxu0 0.0
    %569 = vmatpush1.xpose.msra.mxu0 0.0
    %570 = vmatprep.subr.mxu0 0.0
    %571 = vmatpush1.xpose.msra.mxu0 0.0
    %572 = vmatprep.subr.mxu0 0.0
    %573 = vmatpush1.xpose.msra.mxu0 0.0
    %574 = vmatprep.subr.mxu0 0.0
    %575 = vmatpush1.xpose.msra.mxu0 0.0
    %576 = vmatprep.subr.mxu0 0.0
    %577 = vmatpush1.xpose.msra.mxu0 0.0
    %578 = vmatprep.subr.mxu0 0.0
    %579 = vmatpush1.xpose.msra.mxu0 0.0
    %580 = vmatprep.subr.mxu0 0.0
    %581 = vmatpush1.xpose.msra.mxu0 0.0
    %582 = vmatprep.subr.mxu0 0.0
    %583 = vmatpush1.xpose.msra.mxu0 0.0
    %584 = vmatprep.subr.mxu0 0.0
    %585 = vmatpush1.xpose.msra.mxu0 0.0
    %586 = vmatprep.subr.mxu0 0.0
    %587 = vmatpush1.xpose.msra.mxu0 0.0
    %588 = vmatprep.subr.mxu0 0.0
    %589 = vmatpush1.xpose.msra.mxu0 0.0
    %590 = vmatprep.subr.mxu0 0.0
    %591 = vmatpush1.xpose.msra.mxu0 0.0
    %592 = vmatprep.subr.mxu0 0.0
    %593 = vmatpush1.xpose.msra.mxu0 0.0
    %594 = vmatprep.subr.mxu0 0.0
    %595 = vmatpush1.xpose.msra.mxu0 0.0
    %596 = vmatprep.subr.mxu0 0.0
    %597 = vmatpush1.xpose.msra.mxu0 0.0
    %598 = vmatprep.subr.mxu0 0.0
    %599 = vmatpush1.xpose.msra.mxu0 0.0
    %600 = vmatprep.mubr.f32.mxu0 0.0
    %601 = vmatmul.mubr.f32.gmra.mrb[0].mxu0 %v528
    %v602 = vpop.f32.mrb[0].mxu0
    %v603 = vadd.f32 %v325, %v602
    %v604 = vpop.f32.mrb[0].mxu0
    %605 = vmatprep.mubr.f32.mxu0 0.0
    %606 = vmatmul.mubr.f32.gmra.mrb[0].mxu0 %v530
    %v607 = vpop.f32.mrb[0].mxu0
    %v608 = vadd.f32 %v326, %v607
    %v609 = vpop.f32.mrb[0].mxu0
    %610 = vdwg.mxu0
    %v611 = vsel %vm415, %v603, -inf
    %612 = vmax.xlane.f32.xlu0 %v611
    %v613 = vpop.xlane.xlu0 %612
    %v614 = vsel %vm415, %v608, -inf
    %615 = vmax.xlane.f32.xlu0 %v614
    %v616 = vpop.xlane.xlu0 %615
    %v617 = vsub.f32 %v603, %v613
    %v618 = vsub.f32 %v608, %v616
    %v619 = vmul.f32 %v617, 1.442695
    %v620 = vpow.pop %v619
    %v621 = vmul.f32 %v618, 1.442695
    %v622 = vpow.pop %v621
    %v623 = vsel %vm415, %v620, 0.0
    %624 = vadd.xlane.f32.xlu0 %v623
    %v625 = vpop.xlane.xlu0 %624
    %v626 = vsel %vm415, %v622, 0.0
    %627 = vadd.xlane.f32.xlu0 %v626
    %v628 = vpop.xlane.xlu0 %627
    %v629 = vrcp.pop %v625
    %v630 = vrcp.pop %v628
    %v631 = vmul.f32 %v620, %v629
    %v632 = vmul.f32 %v622, %v630
    %635 = vrot.lane.b32.xlu0 %v317, 120
    %v636 = vpop.permute.xlu0 %635
    %637 = vrot.lane.b32.xlu0 %v322, 120
    %v638 = vpop.permute.xlu0 %637
    %v642 = vsel %vm415, %v631, 0
    %v645 = vsel %vm415, %v632, 0
    %647 = vmatprep.subr.mxu0 0.0
    %648 = vmatpush1.msra.mxu0 %v636
    %649 = vmatprep.subr.mxu0 0.0
    %650 = vmatpush1.msra.mxu0 %v638
    %651 = vmatprep.subr.mxu0 0.0
    %652 = vmatpush1.msra.mxu0 0.0
    %653 = vmatprep.subr.mxu0 0.0
    %654 = vmatpush1.msra.mxu0 0.0
    %655 = vmatprep.subr.mxu0 0.0
    %656 = vmatpush1.msra.mxu0 0.0
    %657 = vmatprep.subr.mxu0 0.0
    %658 = vmatpush1.msra.mxu0 0.0
    %659 = vmatprep.subr.mxu0 0.0
    %660 = vmatpush1.msra.mxu0 0.0
    %661 = vmatprep.subr.mxu0 0.0
    %662 = vmatpush1.msra.mxu0 0.0
    %663 = vmatprep.subr.mxu0 0.0
    %664 = vmatpush1.msra.mxu0 0.0
    %665 = vmatprep.subr.mxu0 0.0
    %666 = vmatpush1.msra.mxu0 0.0
    %667 = vmatprep.subr.mxu0 0.0
    %668 = vmatpush1.msra.mxu0 0.0
    %669 = vmatprep.subr.mxu0 0.0
    %670 = vmatpush1.msra.mxu0 0.0
    %671 = vmatprep.subr.mxu0 0.0
    %672 = vmatpush1.msra.mxu0 0.0
    %673 = vmatprep.subr.mxu0 0.0
    %674 = vmatpush1.msra.mxu0 0.0
    %675 = vmatprep.subr.mxu0 0.0
    %676 = vmatpush1.msra.mxu0 0.0
    %677 = vmatprep.subr.mxu0 0.0
    %678 = vmatpush1.msra.mxu0 0.0
    %679 = vmatprep.subr.mxu0 0.0
    %680 = vmatpush1.msra.mxu0 0.0
    %681 = vmatprep.subr.mxu0 0.0
    %682 = vmatpush1.msra.mxu0 0.0
    %683 = vmatprep.subr.mxu0 0.0
    %684 = vmatpush1.msra.mxu0 0.0
    %685 = vmatprep.subr.mxu0 0.0
    %686 = vmatpush1.msra.mxu0 0.0
    %687 = vmatprep.subr.mxu0 0.0
    %688 = vmatpush1.msra.mxu0 0.0
    %689 = vmatprep.subr.mxu0 0.0
    %690 = vmatpush1.msra.mxu0 0.0
    %691 = vmatprep.subr.mxu0 0.0
    %692 = vmatpush1.msra.mxu0 0.0
    %693 = vmatprep.subr.mxu0 0.0
    %694 = vmatpush1.msra.mxu0 0.0
    %695 = vmatprep.subr.mxu0 0.0
    %696 = vmatpush1.msra.mxu0 0.0
    %697 = vmatprep.subr.mxu0 0.0
    %698 = vmatpush1.msra.mxu0 0.0
    %699 = vmatprep.subr.mxu0 0.0
    %700 = vmatpush1.msra.mxu0 0.0
    %701 = vmatprep.subr.mxu0 0.0
    %702 = vmatpush1.msra.mxu0 0.0
    %703 = vmatprep.subr.mxu0 0.0
    %704 = vmatpush1.msra.mxu0 0.0
    %705 = vmatprep.subr.mxu0 0.0
    %706 = vmatpush1.msra.mxu0 0.0
    %707 = vmatprep.subr.mxu0 0.0
    %708 = vmatpush1.msra.mxu0 0.0
    %709 = vmatprep.subr.mxu0 0.0
    %710 = vmatpush1.msra.mxu0 0.0
    %711 = vmatprep.mubr.f32.mxu0 0.0
    %712 = vmatmul.mubr.f32.gmra.mrb[0].mxu0 %v642
    %v713 = vpop.f32.mrb[0].mxu0
    %v714 = vadd.f32 0.0, %v713
    %v715 = vpop.f32.mrb[0].mxu0
    %716 = vmatprep.mubr.f32.mxu0 0.0
    %717 = vmatmul.mubr.f32.gmra.mrb[0].mxu0 %v645
    %v718 = vpop.f32.mrb[0].mxu0
    %v719 = vadd.f32 0.0, %v718
    %v720 = vpop.f32.mrb[0].mxu0
    %721 = vdwg.mxu0
    %v722 = vld [vmem:[%s6 + $0x8] sm:$0xff]
    %v724 = vsel %vm327, %v714, 0
    %v727 = vsel %vm327, %v719, 0
    %729 = vmatprep.subr.mxu0 0.0
    %730 = vmatpush1.msra.mxu0 %v722
    %731 = vmatprep.subr.mxu0 0.0
    %732 = vmatpush1.msra.mxu0 0.0
    %733 = vmatprep.subr.mxu0 0.0
    %734 = vmatpush1.msra.mxu0 0.0
    %735 = vmatprep.subr.mxu0 0.0
    %736 = vmatpush1.msra.mxu0 0.0
    %737 = vmatprep.subr.mxu0 0.0
    %738 = vmatpush1.msra.mxu0 0.0
    %739 = vmatprep.subr.mxu0 0.0
    %740 = vmatpush1.msra.mxu0 0.0
    %741 = vmatprep.subr.mxu0 0.0
    %742 = vmatpush1.msra.mxu0 0.0
    %743 = vmatprep.subr.mxu0 0.0
    %744 = vmatpush1.msra.mxu0 0.0
    %745 = vmatprep.subr.mxu0 0.0
    %746 = vmatpush1.msra.mxu0 0.0
    %747 = vmatprep.subr.mxu0 0.0
    %748 = vmatpush1.msra.mxu0 0.0
    %749 = vmatprep.subr.mxu0 0.0
    %750 = vmatpush1.msra.mxu0 0.0
    %751 = vmatprep.subr.mxu0 0.0
    %752 = vmatpush1.msra.mxu0 0.0
    %753 = vmatprep.subr.mxu0 0.0
    %754 = vmatpush1.msra.mxu0 0.0
    %755 = vmatprep.subr.mxu0 0.0
    %756 = vmatpush1.msra.mxu0 0.0
    %757 = vmatprep.subr.mxu0 0.0
    %758 = vmatpush1.msra.mxu0 0.0
    %759 = vmatprep.subr.mxu0 0.0
    %760 = vmatpush1.msra.mxu0 0.0
    %761 = vmatprep.subr.mxu0 0.0
    %762 = vmatpush1.msra.mxu0 0.0
    %763 = vmatprep.subr.mxu0 0.0
    %764 = vmatpush1.msra.mxu0 0.0
    %765 = vmatprep.subr.mxu0 0.0
    %766 = vmatpush1.msra.mxu0 0.0
    %767 = vmatprep.subr.mxu0 0.0
    %768 = vmatpush1.msra.mxu0 0.0
    %769 = vmatprep.subr.mxu0 0.0
    %770 = vmatpush1.msra.mxu0 0.0
    %771 = vmatprep.subr.mxu0 0.0
    %772 = vmatpush1.msra.mxu0 0.0
    %773 = vmatprep.subr.mxu0 0.0
    %774 = vmatpush1.msra.mxu0 0.0
    %775 = vmatprep.subr.mxu0 0.0
    %776 = vmatpush1.msra.mxu0 0.0
    %777 = vmatprep.subr.mxu0 0.0
    %778 = vmatpush1.msra.mxu0 0.0
    %779 = vmatprep.subr.mxu0 0.0
    %780 = vmatpush1.msra.mxu0 0.0
    %781 = vmatprep.subr.mxu0 0.0
    %782 = vmatpush1.msra.mxu0 0.0
    %783 = vmatprep.subr.mxu0 0.0
    %784 = vmatpush1.msra.mxu0 0.0
    %785 = vmatprep.subr.mxu0 0.0
    %786 = vmatpush1.msra.mxu0 0.0
    %787 = vmatprep.subr.mxu0 0.0
    %788 = vmatpush1.msra.mxu0 0.0
    %789 = vmatprep.subr.mxu0 0.0
    %790 = vmatpush1.msra.mxu0 0.0
    %791 = vmatprep.subr.mxu0 0.0
    %792 = vmatpush1.msra.mxu0 0.0
    %793 = vmatprep.mubr.f32.mxu0 0.0
    %794 = vmatmul.mubr.f32.gmra.mrb[0].mxu0 %v724
    %v795 = vpop.f32.mrb[0].mxu0
    %v796 = vadd.f32 0.0, %v795
    %v797 = vpop.f32.mrb[0].mxu0
    %798 = vmatprep.mubr.f32.mxu0 0.0
    %799 = vmatmul.mubr.f32.gmra.mrb[0].mxu0 %v727
    %v800 = vpop.f32.mrb[0].mxu0
    %v801 = vadd.f32 0.0, %v800
    %v802 = vpop.f32.mrb[0].mxu0
    %803 = vdwg.mxu0
    %v805 = vsel %vm327, %v511, 0
    %v808 = vsel %vm327, %v516, 0
    %810 = vmatprep.subr.mxu0 0.0
    %811 = vmatpush1.msra.mxu0 %v519
    %812 = vmatprep.subr.mxu0 0.0
    %813 = vmatpush1.msra.mxu0 0.0
    %814 = vmatprep.subr.mxu0 0.0
    %815 = vmatpush1.msra.mxu0 0.0
    %816 = vmatprep.subr.mxu0 0.0
    %817 = vmatpush1.msra.mxu0 0.0
    %818 = vmatprep.subr.mxu0 0.0
    %819 = vmatpush1.msra.mxu0 0.0
    %820 = vmatprep.subr.mxu0 0.0
    %821 = vmatpush1.msra.mxu0 0.0
    %822 = vmatprep.subr.mxu0 0.0
    %823 = vmatpush1.msra.mxu0 0.0
    %824 = vmatprep.subr.mxu0 0.0
    %825 = vmatpush1.msra.mxu0 0.0
    %826 = vmatprep.subr.mxu0 0.0
    %827 = vmatpush1.msra.mxu0 0.0
    %828 = vmatprep.subr.mxu0 0.0
    %829 = vmatpush1.msra.mxu0 0.0
    %830 = vmatprep.subr.mxu0 0.0
    %831 = vmatpush1.msra.mxu0 0.0
    %832 = vmatprep.subr.mxu0 0.0
    %833 = vmatpush1.msra.mxu0 0.0
    %834 = vmatprep.subr.mxu0 0.0
    %835 = vmatpush1.msra.mxu0 0.0
    %836 = vmatprep.subr.mxu0 0.0
    %837 = vmatpush1.msra.mxu0 0.0
    %838 = vmatprep.subr.mxu0 0.0
    %839 = vmatpush1.msra.mxu0 0.0
    %840 = vmatprep.subr.mxu0 0.0
    %841 = vmatpush1.msra.mxu0 0.0
    %842 = vmatprep.subr.mxu0 0.0
    %843 = vmatpush1.msra.mxu0 0.0
    %844 = vmatprep.subr.mxu0 0.0
    %845 = vmatpush1.msra.mxu0 0.0
    %846 = vmatprep.subr.mxu0 0.0
    %847 = vmatpush1.msra.mxu0 0.0
    %848 = vmatprep.subr.mxu0 0.0
    %849 = vmatpush1.msra.mxu0 0.0
    %850 = vmatprep.subr.mxu0 0.0
    %851 = vmatpush1.msra.mxu0 0.0
    %852 = vmatprep.subr.mxu0 0.0
    %853 = vmatpush1.msra.mxu0 0.0
    %854 = vmatprep.subr.mxu0 0.0
    %855 = vmatpush1.msra.mxu0 0.0
    %856 = vmatprep.subr.mxu0 0.0
    %857 = vmatpush1.msra.mxu0 0.0
    %858 = vmatprep.subr.mxu0 0.0
    %859 = vmatpush1.msra.mxu0 0.0
    %860 = vmatprep.subr.mxu0 0.0
    %861 = vmatpush1.msra.mxu0 0.0
    %862 = vmatprep.subr.mxu0 0.0
    %863 = vmatpush1.msra.mxu0 0.0
    %864 = vmatprep.subr.mxu0 0.0
    %865 = vmatpush1.msra.mxu0 0.0
    %866 = vmatprep.subr.mxu0 0.0
    %867 = vmatpush1.msra.mxu0 0.0
    %868 = vmatprep.subr.mxu0 0.0
    %869 = vmatpush1.msra.mxu0 0.0
    %870 = vmatprep.subr.mxu0 0.0
    %871 = vmatpush1.msra.mxu0 0.0
    %872 = vmatprep.subr.mxu0 0.0
    %873 = vmatpush1.msra.mxu0 0.0
    %874 = vmatprep.mubr.f32.mxu0 0.0
    %875 = vmatmul.mubr.f32.gmra.mrb[0].mxu0 %v805
    %v876 = vpop.f32.mrb[0].mxu0
    %v877 = vadd.f32 %v796, %v876
    %v878 = vpop.f32.mrb[0].mxu0
    %879 = vmatprep.mubr.f32.mxu0 0.0
    %880 = vmatmul.mubr.f32.gmra.mrb[0].mxu0 %v808
    %v881 = vpop.f32.mrb[0].mxu0
    %v882 = vadd.f32 %v801, %v881
    %v883 = vpop.f32.mrb[0].mxu0
    %884 = vdwg.mxu0
    %885 = vrot.lane.b32.xlu0 %v117, 112
    %v886 = vpop.permute.xlu0 %885
    %887 = vrot.lane.b32.xlu0 %v122, 112
    %v888 = vpop.permute.xlu0 %887
    %889 = vrot.lane.b32.xlu0 %v219, 112
    %v890 = vpop.permute.xlu0 %889
    %891 = vrot.lane.b32.xlu0 %v224, 112
    %v892 = vpop.permute.xlu0 %891
    %v893 = vsel %vm327, %v886, 0
    %v895 = vsel %vm327, %v888, 0
    %v897 = vsel %vm327, %v890, 0
    %v899 = vsel %vm327, %v892, 0
    %901 = vmatprep.subr.mxu0 0.0
    %902 = vmatpush1.xpose.msra.mxu0 %v897
    %903 = vmatprep.subr.mxu0 0.0
    %904 = vmatpush1.xpose.msra.mxu0 %v899
    %905 = vmatprep.subr.mxu0 0.0
    %906 = vmatpush1.xpose.msra.mxu0 0.0
    %907 = vmatprep.subr.mxu0 0.0
    %908 = vmatpush1.xpose.msra.mxu0 0.0
    %909 = vmatprep.subr.mxu0 0.0
    %910 = vmatpush1.xpose.msra.mxu0 0.0
    %911 = vmatprep.subr.mxu0 0.0
    %912 = vmatpush1.xpose.msra.mxu0 0.0
    %913 = vmatprep.subr.mxu0 0.0
    %914 = vmatpush1.xpose.msra.mxu0 0.0
    %915 = vmatprep.subr.mxu0 0.0
    %916 = vmatpush1.xpose.msra.mxu0 0.0
    %917 = vmatprep.subr.mxu0 0.0
    %918 = vmatpush1.xpose.msra.mxu0 0.0
    %919 = vmatprep.subr.mxu0 0.0
    %920 = vmatpush1.xpose.msra.mxu0 0.0
    %921 = vmatprep.subr.mxu0 0.0
    %922 = vmatpush1.xpose.msra.mxu0 0.0
    %923 = vmatprep.subr.mxu0 0.0
    %924 = vmatpush1.xpose.msra.mxu0 0.0
    %925 = vmatprep.subr.mxu0 0.0
    %926 = vmatpush1.xpose.msra.mxu0 0.0
    %927 = vmatprep.subr.mxu0 0.0
    %928 = vmatpush1.xpose.msra.mxu0 0.0
    %929 = vmatprep.subr.mxu0 0.0
    %930 = vmatpush1.xpose.msra.mxu0 0.0
    %931 = vmatprep.subr.mxu0 0.0
    %932 = vmatpush1.xpose.msra.mxu0 0.0
    %933 = vmatprep.subr.mxu0 0.0
    %934 = vmatpush1.xpose.msra.mxu0 0.0
    %935 = vmatprep.subr.mxu0 0.0
    %936 = vmatpush1.xpose.msra.mxu0 0.0
    %937 = vmatprep.subr.mxu0 0.0
    %938 = vmatpush1.xpose.msra.mxu0 0.0
    %939 = vmatprep.subr.mxu0 0.0
    %940 = vmatpush1.xpose.msra.mxu0 0.0
    %941 = vmatprep.subr.mxu0 0.0
    %942 = vmatpush1.xpose.msra.mxu0 0.0
    %943 = vmatprep.subr.mxu0 0.0
    %944 = vmatpush1.xpose.msra.mxu0 0.0
    %945 = vmatprep.subr.mxu0 0.0
    %946 = vmatpush1.xpose.msra.mxu0 0.0
    %947 = vmatprep.subr.mxu0 0.0
    %948 = vmatpush1.xpose.msra.mxu0 0.0
    %949 = vmatprep.subr.mxu0 0.0
    %950 = vmatpush1.xpose.msra.mxu0 0.0
    %951 = vmatprep.subr.mxu0 0.0
    %952 = vmatpush1.xpose.msra.mxu0 0.0
    %953 = vmatprep.subr.mxu0 0.0
    %954 = vmatpush1.xpose.msra.mxu0 0.0
    %955 = vmatprep.subr.mxu0 0.0
    %956 = vmatpush1.xpose.msra.mxu0 0.0
    %957 = vmatprep.subr.mxu0 0.0
    %958 = vmatpush1.xpose.msra.mxu0 0.0
    %959 = vmatprep.subr.mxu0 0.0
    %960 = vmatpush1.xpose.msra.mxu0 0.0
    %961 = vmatprep.subr.mxu0 0.0
    %962 = vmatpush1.xpose.msra.mxu0 0.0
    %963 = vmatprep.subr.mxu0 0.0
    %964 = vmatpush1.xpose.msra.mxu0 0.0
    %965 = vmatprep.mubr.f32.mxu0 0.0
    %966 = vmatmul.mubr.f32.gmra.mrb[0].mxu0 %v893
    %v967 = vpop.f32.mrb[0].mxu0
    %v968 = vadd.f32 %v325, %v967
    %v969 = vpop.f32.mrb[0].mxu0
    %970 = vmatprep.mubr.f32.mxu0 0.0
    %971 = vmatmul.mubr.f32.gmra.mrb[0].mxu0 %v895
    %v972 = vpop.f32.mrb[0].mxu0
    %v973 = vadd.f32 %v326, %v972
    %v974 = vpop.f32.mrb[0].mxu0
    %975 = vdwg.mxu0
    %v976 = vsel %vm415, %v968, -inf
    %977 = vmax.xlane.f32.xlu0 %v976
    %v978 = vpop.xlane.xlu0 %977
    %v979 = vsel %vm415, %v973, -inf
    %980 = vmax.xlane.f32.xlu0 %v979
    %v981 = vpop.xlane.xlu0 %980
    %v982 = vsub.f32 %v968, %v978
    %v983 = vsub.f32 %v973, %v981
    %v984 = vmul.f32 %v982, 1.442695
    %v985 = vpow.pop %v984
    %v986 = vmul.f32 %v983, 1.442695
    %v987 = vpow.pop %v986
    %v988 = vsel %vm415, %v985, 0.0
    %989 = vadd.xlane.f32.xlu0 %v988
    %v990 = vpop.xlane.xlu0 %989
    %v991 = vsel %vm415, %v987, 0.0
    %992 = vadd.xlane.f32.xlu0 %v991
    %v993 = vpop.xlane.xlu0 %992
    %v994 = vrcp.pop %v990
    %v995 = vrcp.pop %v993
    %v996 = vmul.f32 %v985, %v994
    %v997 = vmul.f32 %v987, %v995
    %998 = vrot.lane.b32.xlu0 %v317, 112
    %v999 = vpop.permute.xlu0 %998
    %1000 = vrot.lane.b32.xlu0 %v322, 112
    %v1001 = vpop.permute.xlu0 %1000
    %v1005 = vsel %vm415, %v996, 0
    %v1008 = vsel %vm415, %v997, 0
    %1010 = vmatprep.subr.mxu0 0.0
    %1011 = vmatpush1.msra.mxu0 %v999
    %1012 = vmatprep.subr.mxu0 0.0
    %1013 = vmatpush1.msra.mxu0 %v1001
    %1014 = vmatprep.subr.mxu0 0.0
    %1015 = vmatpush1.msra.mxu0 0.0
    %1016 = vmatprep.subr.mxu0 0.0
    %1017 = vmatpush1.msra.mxu0 0.0
    %1018 = vmatprep.subr.mxu0 0.0
    %1019 = vmatpush1.msra.mxu0 0.0
    %1020 = vmatprep.subr.mxu0 0.0
    %1021 = vmatpush1.msra.mxu0 0.0
    %1022 = vmatprep.subr.mxu0 0.0
    %1023 = vmatpush1.msra.mxu0 0.0
    %1024 = vmatprep.subr.mxu0 0.0
    %1025 = vmatpush1.msra.mxu0 0.0
    %1026 = vmatprep.subr.mxu0 0.0
    %1027 = vmatpush1.msra.mxu0 0.0
    %1028 = vmatprep.subr.mxu0 0.0
    %1029 = vmatpush1.msra.mxu0 0.0
    %1030 = vmatprep.subr.mxu0 0.0
    %1031 = vmatpush1.msra.mxu0 0.0
    %1032 = vmatprep.subr.mxu0 0.0
    %1033 = vmatpush1.msra.mxu0 0.0
    %1034 = vmatprep.subr.mxu0 0.0
    %1035 = vmatpush1.msra.mxu0 0.0
    %1036 = vmatprep.subr.mxu0 0.0
    %1037 = vmatpush1.msra.mxu0 0.0
    %1038 = vmatprep.subr.mxu0 0.0
    %1039 = vmatpush1.msra.mxu0 0.0
    %1040 = vmatprep.subr.mxu0 0.0
    %1041 = vmatpush1.msra.mxu0 0.0
    %1042 = vmatprep.subr.mxu0 0.0
    %1043 = vmatpush1.msra.mxu0 0.0
    %1044 = vmatprep.subr.mxu0 0.0
    %1045 = vmatpush1.msra.mxu0 0.0
    %1046 = vmatprep.subr.mxu0 0.0
    %1047 = vmatpush1.msra.mxu0 0.0
    %1048 = vmatprep.subr.mxu0 0.0
    %1049 = vmatpush1.msra.mxu0 0.0
    %1050 = vmatprep.subr.mxu0 0.0
    %1051 = vmatpush1.msra.mxu0 0.0
    %1052 = vmatprep.subr.mxu0 0.0
    %1053 = vmatpush1.msra.mxu0 0.0
    %1054 = vmatprep.subr.mxu0 0.0
    %1055 = vmatpush1.msra.mxu0 0.0
    %1056 = vmatprep.subr.mxu0 0.0
    %1057 = vmatpush1.msra.mxu0 0.0
    %1058 = vmatprep.subr.mxu0 0.0
    %1059 = vmatpush1.msra.mxu0 0.0
    %1060 = vmatprep.subr.mxu0 0.0
    %1061 = vmatpush1.msra.mxu0 0.0
    %1062 = vmatprep.subr.mxu0 0.0
    %1063 = vmatpush1.msra.mxu0 0.0
    %1064 = vmatprep.subr.mxu0 0.0
    %1065 = vmatpush1.msra.mxu0 0.0
    %1066 = vmatprep.subr.mxu0 0.0
    %1067 = vmatpush1.msra.mxu0 0.0
    %1068 = vmatprep.subr.mxu0 0.0
    %1069 = vmatpush1.msra.mxu0 0.0
    %1070 = vmatprep.subr.mxu0 0.0
    %1071 = vmatpush1.msra.mxu0 0.0
    %1072 = vmatprep.subr.mxu0 0.0
    %1073 = vmatpush1.msra.mxu0 0.0
    %1074 = vmatprep.mubr.f32.mxu0 0.0
    %1075 = vmatmul.mubr.f32.gmra.mrb[0].mxu0 %v1005
    %v1076 = vpop.f32.mrb[0].mxu0
    %v1077 = vadd.f32 0.0, %v1076
    %v1078 = vpop.f32.mrb[0].mxu0
    %1079 = vmatprep.mubr.f32.mxu0 0.0
    %1080 = vmatmul.mubr.f32.gmra.mrb[0].mxu0 %v1008
    %v1081 = vpop.f32.mrb[0].mxu0
    %v1082 = vadd.f32 0.0, %v1081
    %v1083 = vpop.f32.mrb[0].mxu0
    %1084 = vdwg.mxu0
    %v1085 = vld [vmem:[%s6 + $0x10] sm:$0xff]
    %v1087 = vsel %vm327, %v1077, 0
    %v1090 = vsel %vm327, %v1082, 0
    %1092 = vmatprep.subr.mxu0 0.0
    %1093 = vmatpush1.msra.mxu0 %v1085
    %1094 = vmatprep.subr.mxu0 0.0
    %1095 = vmatpush1.msra.mxu0 0.0
    %1096 = vmatprep.subr.mxu0 0.0
    %1097 = vmatpush1.msra.mxu0 0.0
    %1098 = vmatprep.subr.mxu0 0.0
    %1099 = vmatpush1.msra.mxu0 0.0
    %1100 = vmatprep.subr.mxu0 0.0
    %1101 = vmatpush1.msra.mxu0 0.0
    %1102 = vmatprep.subr.mxu0 0.0
    %1103 = vmatpush1.msra.mxu0 0.0
    %1104 = vmatprep.subr.mxu0 0.0
    %1105 = vmatpush1.msra.mxu0 0.0
    %1106 = vmatprep.subr.mxu0 0.0
    %1107 = vmatpush1.msra.mxu0 0.0
    %1108 = vmatprep.subr.mxu0 0.0
    %1109 = vmatpush1.msra.mxu0 0.0
    %1110 = vmatprep.subr.mxu0 0.0
    %1111 = vmatpush1.msra.mxu0 0.0
    %1112 = vmatprep.subr.mxu0 0.0
    %1113 = vmatpush1.msra.mxu0 0.0
    %1114 = vmatprep.subr.mxu0 0.0
    %1115 = vmatpush1.msra.mxu0 0.0
    %1116 = vmatprep.subr.mxu0 0.0
    %1117 = vmatpush1.msra.mxu0 0.0
    %1118 = vmatprep.subr.mxu0 0.0
    %1119 = vmatpush1.msra.mxu0 0.0
    %1120 = vmatprep.subr.mxu0 0.0
    %1121 = vmatpush1.msra.mxu0 0.0
    %1122 = vmatprep.subr.mxu0 0.0
    %1123 = vmatpush1.msra.mxu0 0.0
    %1124 = vmatprep.subr.mxu0 0.0
    %1125 = vmatpush1.msra.mxu0 0.0
    %1126 = vmatprep.subr.mxu0 0.0
    %1127 = vmatpush1.msra.mxu0 0.0
    %1128 = vmatprep.subr.mxu0 0.0
    %1129 = vmatpush1.msra.mxu0 0.0
    %1130 = vmatprep.subr.mxu0 0.0
    %1131 = vmatpush1.msra.mxu0 0.0
    %1132 = vmatprep.subr.mxu0 0.0
    %1133 = vmatpush1.msra.mxu0 0.0
    %1134 = vmatprep.subr.mxu0 0.0
    %1135 = vmatpush1.msra.mxu0 0.0
    %1136 = vmatprep.subr.mxu0 0.0
    %1137 = vmatpush1.msra.mxu0 0.0
    %1138 = vmatprep.subr.mxu0 0.0
    %1139 = vmatpush1.msra.mxu0 0.0
    %1140 = vmatprep.subr.mxu0 0.0
    %1141 = vmatpush1.msra.mxu0 0.0
    %1142 = vmatprep.subr.mxu0 0.0
    %1143 = vmatpush1.msra.mxu0 0.0
    %1144 = vmatprep.subr.mxu0 0.0
    %1145 = vmatpush1.msra.mxu0 0.0
    %1146 = vmatprep.subr.mxu0 0.0
    %1147 = vmatpush1.msra.mxu0 0.0
    %1148 = vmatprep.subr.mxu0 0.0
    %1149 = vmatpush1.msra.mxu0 0.0
    %1150 = vmatprep.subr.mxu0 0.0
    %1151 = vmatpush1.msra.mxu0 0.0
    %1152 = vmatprep.subr.mxu0 0.0
    %1153 = vmatpush1.msra.mxu0 0.0
    %1154 = vmatprep.subr.mxu0 0.0
    %1155 = vmatpush1.msra.mxu0 0.0
    %1156 = vmatprep.mubr.f32.mxu0 0.0
    %1157 = vmatmul.mubr.f32.gmra.mrb[0].mxu0 %v1087
    %v1158 = vpop.f32.mrb[0].mxu0
    %v1159 = vadd.f32 0.0, %v1158
    %v1160 = vpop.f32.mrb[0].mxu0
    %1161 = vmatprep.mubr.f32.mxu0 0.0
    %1162 = vmatmul.mubr.f32.gmra.mrb[0].mxu0 %v1090
    %v1163 = vpop.f32.mrb[0].mxu0
    %v1164 = vadd.f32 0.0, %v1163
    %v1165 = vpop.f32.mrb[0].mxu0
    %1166 = vdwg.mxu0
    %v1167 = vadd.f32 %v877, %v1159
    %v1168 = vadd.f32 %v882, %v1164
    %1169 = vrot.lane.b32.xlu0 %v117, 104
    %v1170 = vpop.permute.xlu0 %1169
    %1171 = vrot.lane.b32.xlu0 %v122, 104
    %v1172 = vpop.permute.xlu0 %1171
    %1173 = vrot.lane.b32.xlu0 %v219, 104
    %v1174 = vpop.permute.xlu0 %1173
    %1175 = vrot.lane.b32.xlu0 %v224, 104
    %v1176 = vpop.permute.xlu0 %1175
    %v1177 = vsel %vm327, %v1170, 0
    %v1179 = vsel %vm327, %v1172, 0
    %v1181 = vsel %vm327, %v1174, 0
    %v1183 = vsel %vm327, %v1176, 0
    %1185 = vmatprep.subr.mxu0 0.0
    %1186 = vmatpush1.xpose.msra.mxu0 %v1181
    %1187 = vmatprep.subr.mxu0 0.0
    %1188 = vmatpush1.xpose.msra.mxu0 %v1183
    %1189 = vmatprep.subr.mxu0 0.0
    %1190 = vmatpush1.xpose.msra.mxu0 0.0
    %1191 = vmatprep.subr.mxu0 0.0
    %1192 = vmatpush1.xpose.msra.mxu0 0.0
    %1193 = vmatprep.subr.mxu0 0.0
    %1194 = vmatpush1.xpose.msra.mxu0 0.0
    %1195 = vmatprep.subr.mxu0 0.0
    %1196 = vmatpush1.xpose.msra.mxu0 0.0
    %1197 = vmatprep.subr.mxu0 0.0
    %1198 = vmatpush1.xpose.msra.mxu0 0.0
    %1199 = vmatprep.subr.mxu0 0.0
    %1200 = vmatpush1.xpose.msra.mxu0 0.0
    %1201 = vmatprep.subr.mxu0 0.0
    %1202 = vmatpush1.xpose.msra.mxu0 0.0
    %1203 = vmatprep.subr.mxu0 0.0
    %1204 = vmatpush1.xpose.msra.mxu0 0.0
    %1205 = vmatprep.subr.mxu0 0.0
    %1206 = vmatpush1.xpose.msra.mxu0 0.0
    %1207 = vmatprep.subr.mxu0 0.0
    %1208 = vmatpush1.xpose.msra.mxu0 0.0
    %1209 = vmatprep.subr.mxu0 0.0
    %1210 = vmatpush1.xpose.msra.mxu0 0.0
    %1211 = vmatprep.subr.mxu0 0.0
    %1212 = vmatpush1.xpose.msra.mxu0 0.0
    %1213 = vmatprep.subr.mxu0 0.0
    %1214 = vmatpush1.xpose.msra.mxu0 0.0
    %1215 = vmatprep.subr.mxu0 0.0
    %1216 = vmatpush1.xpose.msra.mxu0 0.0
    %1217 = vmatprep.subr.mxu0 0.0
    %1218 = vmatpush1.xpose.msra.mxu0 0.0
    %1219 = vmatprep.subr.mxu0 0.0
    %1220 = vmatpush1.xpose.msra.mxu0 0.0
    %1221 = vmatprep.subr.mxu0 0.0
    %1222 = vmatpush1.xpose.msra.mxu0 0.0
    %1223 = vmatprep.subr.mxu0 0.0
    %1224 = vmatpush1.xpose.msra.mxu0 0.0
    %1225 = vmatprep.subr.mxu0 0.0
    %1226 = vmatpush1.xpose.msra.mxu0 0.0
    %1227 = vmatprep.subr.mxu0 0.0
    %1228 = vmatpush1.xpose.msra.mxu0 0.0
    %1229 = vmatprep.subr.mxu0 0.0
    %1230 = vmatpush1.xpose.msra.mxu0 0.0
    %1231 = vmatprep.subr.mxu0 0.0
    %1232 = vmatpush1.xpose.msra.mxu0 0.0
    %1233 = vmatprep.subr.mxu0 0.0
    %1234 = vmatpush1.xpose.msra.mxu0 0.0
    %1235 = vmatprep.subr.mxu0 0.0
    %1236 = vmatpush1.xpose.msra.mxu0 0.0
    %1237 = vmatprep.subr.mxu0 0.0
    %1238 = vmatpush1.xpose.msra.mxu0 0.0
    %1239 = vmatprep.subr.mxu0 0.0
    %1240 = vmatpush1.xpose.msra.mxu0 0.0
    %1241 = vmatprep.subr.mxu0 0.0
    %1242 = vmatpush1.xpose.msra.mxu0 0.0
    %1243 = vmatprep.subr.mxu0 0.0
    %1244 = vmatpush1.xpose.msra.mxu0 0.0
    %1245 = vmatprep.subr.mxu0 0.0
    %1246 = vmatpush1.xpose.msra.mxu0 0.0
    %1247 = vmatprep.subr.mxu0 0.0
    %1248 = vmatpush1.xpose.msra.mxu0 0.0
    %1249 = vmatprep.mubr.f32.mxu0 0.0
    %1250 = vmatmul.mubr.f32.gmra.mrb[0].mxu0 %v1177
    %v1251 = vpop.f32.mrb[0].mxu0
    %v1252 = vadd.f32 %v325, %v1251
    %v1253 = vpop.f32.mrb[0].mxu0
    %1254 = vmatprep.mubr.f32.mxu0 0.0
    %1255 = vmatmul.mubr.f32.gmra.mrb[0].mxu0 %v1179
    %v1256 = vpop.f32.mrb[0].mxu0
    %v1257 = vadd.f32 %v326, %v1256
    %v1258 = vpop.f32.mrb[0].mxu0
    %1259 = vdwg.mxu0
    %v1260 = vsel %vm415, %v1252, -inf
    %1261 = vmax.xlane.f32.xlu0 %v1260
    %v1262 = vpop.xlane.xlu0 %1261
    %v1263 = vsel %vm415, %v1257, -inf
    %1264 = vmax.xlane.f32.xlu0 %v1263
    %v1265 = vpop.xlane.xlu0 %1264
    %v1266 = vsub.f32 %v1252, %v1262
    %v1267 = vsub.f32 %v1257, %v1265
    %v1268 = vmul.f32 %v1266, 1.442695
    %v1269 = vpow.pop %v1268
    %v1270 = vmul.f32 %v1267, 1.442695
    %v1271 = vpow.pop %v1270
    %v1272 = vsel %vm415, %v1269, 0.0
    %1273 = vadd.xlane.f32.xlu0 %v1272
    %v1274 = vpop.xlane.xlu0 %1273
    %v1275 = vsel %vm415, %v1271, 0.0
    %1276 = vadd.xlane.f32.xlu0 %v1275
    %v1277 = vpop.xlane.xlu0 %1276
    %v1278 = vrcp.pop %v1274
    %v1279 = vrcp.pop %v1277
    %v1280 = vmul.f32 %v1269, %v1278
    %v1281 = vmul.f32 %v1271, %v1279
    %1282 = vrot.lane.b32.xlu0 %v317, 104
    %v1283 = vpop.permute.xlu0 %1282
    %1284 = vrot.lane.b32.xlu0 %v322, 104
    %v1285 = vpop.permute.xlu0 %1284
    %v1289 = vsel %vm415, %v1280, 0
    %v1292 = vsel %vm415, %v1281, 0
    %1294 = vmatprep.subr.mxu0 0.0
    %1295 = vmatpush1.msra.mxu0 %v1283
    %1296 = vmatprep.subr.mxu0 0.0
    %1297 = vmatpush1.msra.mxu0 %v1285
    %1298 = vmatprep.subr.mxu0 0.0
    %1299 = vmatpush1.msra.mxu0 0.0
    %1300 = vmatprep.subr.mxu0 0.0
    %1301 = vmatpush1.msra.mxu0 0.0
    %1302 = vmatprep.subr.mxu0 0.0
    %1303 = vmatpush1.msra.mxu0 0.0
    %1304 = vmatprep.subr.mxu0 0.0
    %1305 = vmatpush1.msra.mxu0 0.0
    %1306 = vmatprep.subr.mxu0 0.0
    %1307 = vmatpush1.msra.mxu0 0.0
    %1308 = vmatprep.subr.mxu0 0.0
    %1309 = vmatpush1.msra.mxu0 0.0
    %1310 = vmatprep.subr.mxu0 0.0
    %1311 = vmatpush1.msra.mxu0 0.0
    %1312 = vmatprep.subr.mxu0 0.0
    %1313 = vmatpush1.msra.mxu0 0.0
    %1314 = vmatprep.subr.mxu0 0.0
    %1315 = vmatpush1.msra.mxu0 0.0
    %1316 = vmatprep.subr.mxu0 0.0
    %1317 = vmatpush1.msra.mxu0 0.0
    %1318 = vmatprep.subr.mxu0 0.0
    %1319 = vmatpush1.msra.mxu0 0.0
    %1320 = vmatprep.subr.mxu0 0.0
    %1321 = vmatpush1.msra.mxu0 0.0
    %1322 = vmatprep.subr.mxu0 0.0
    %1323 = vmatpush1.msra.mxu0 0.0
    %1324 = vmatprep.subr.mxu0 0.0
    %1325 = vmatpush1.msra.mxu0 0.0
    %1326 = vmatprep.subr.mxu0 0.0
    %1327 = vmatpush1.msra.mxu0 0.0
    %1328 = vmatprep.subr.mxu0 0.0
    %1329 = vmatpush1.msra.mxu0 0.0
    %1330 = vmatprep.subr.mxu0 0.0
    %1331 = vmatpush1.msra.mxu0 0.0
    %1332 = vmatprep.subr.mxu0 0.0
    %1333 = vmatpush1.msra.mxu0 0.0
    %1334 = vmatprep.subr.mxu0 0.0
    %1335 = vmatpush1.msra.mxu0 0.0
    %1336 = vmatprep.subr.mxu0 0.0
    %1337 = vmatpush1.msra.mxu0 0.0
    %1338 = vmatprep.subr.mxu0 0.0
    %1339 = vmatpush1.msra.mxu0 0.0
    %1340 = vmatprep.subr.mxu0 0.0
    %1341 = vmatpush1.msra.mxu0 0.0
    %1342 = vmatprep.subr.mxu0 0.0
    %1343 = vmatpush1.msra.mxu0 0.0
    %1344 = vmatprep.subr.mxu0 0.0
    %1345 = vmatpush1.msra.mxu0 0.0
    %1346 = vmatprep.subr.mxu0 0.0
    %1347 = vmatpush1.msra.mxu0 0.0
    %1348 = vmatprep.subr.mxu0 0.0
    %1349 = vmatpush1.msra.mxu0 0.0
    %1350 = vmatprep.subr.mxu0 0.0
    %1351 = vmatpush1.msra.mxu0 0.0
    %1352 = vmatprep.subr.mxu0 0.0
    %1353 = vmatpush1.msra.mxu0 0.0
    %1354 = vmatprep.subr.mxu0 0.0
    %1355 = vmatpush1.msra.mxu0 0.0
    %1356 = vmatprep.subr.mxu0 0.0
    %1357 = vmatpush1.msra.mxu0 0.0
    %1358 = vmatprep.mubr.f32.mxu0 0.0
    %1359 = vmatmul.mubr.f32.gmra.mrb[0].mxu0 %v1289
    %v1360 = vpop.f32.mrb[0].mxu0
    %v1361 = vadd.f32 0.0, %v1360
    %v1362 = vpop.f32.mrb[0].mxu0
    %1363 = vmatprep.mubr.f32.mxu0 0.0
    %1364 = vmatmul.mubr.f32.gmra.mrb[0].mxu0 %v1292
    %v1365 = vpop.f32.mrb[0].mxu0
    %v1366 = vadd.f32 0.0, %v1365
    %v1367 = vpop.f32.mrb[0].mxu0
    %1368 = vdwg.mxu0
    %v1369 = vld [vmem:[%s6 + $0x18] sm:$0xff]
    %v1371 = vsel %vm327, %v1361, 0
    %v1374 = vsel %vm327, %v1366, 0
    %1376 = vmatprep.subr.mxu0 0.0
    %1377 = vmatpush1.msra.mxu0 %v1369
    %1378 = vmatprep.subr.mxu0 0.0
    %1379 = vmatpush1.msra.mxu0 0.0
    %1380 = vmatprep.subr.mxu0 0.0
    %1381 = vmatpush1.msra.mxu0 0.0
    %1382 = vmatprep.subr.mxu0 0.0
    %1383 = vmatpush1.msra.mxu0 0.0
    %1384 = vmatprep.subr.mxu0 0.0
    %1385 = vmatpush1.msra.mxu0 0.0
    %1386 = vmatprep.subr.mxu0 0.0
    %1387 = vmatpush1.msra.mxu0 0.0
    %1388 = vmatprep.subr.mxu0 0.0
    %1389 = vmatpush1.msra.mxu0 0.0
    %1390 = vmatprep.subr.mxu0 0.0
    %1391 = vmatpush1.msra.mxu0 0.0
    %1392 = vmatprep.subr.mxu0 0.0
    %1393 = vmatpush1.msra.mxu0 0.0
    %1394 = vmatprep.subr.mxu0 0.0
    %1395 = vmatpush1.msra.mxu0 0.0
    %1396 = vmatprep.subr.mxu0 0.0
    %1397 = vmatpush1.msra.mxu0 0.0
    %1398 = vmatprep.subr.mxu0 0.0
    %1399 = vmatpush1.msra.mxu0 0.0
    %1400 = vmatprep.subr.mxu0 0.0
    %1401 = vmatpush1.msra.mxu0 0.0
    %1402 = vmatprep.subr.mxu0 0.0
    %1403 = vmatpush1.msra.mxu0 0.0
    %1404 = vmatprep.subr.mxu0 0.0
    %1405 = vmatpush1.msra.mxu0 0.0
    %1406 = vmatprep.subr.mxu0 0.0
    %1407 = vmatpush1.msra.mxu0 0.0
    %1408 = vmatprep.subr.mxu0 0.0
    %1409 = vmatpush1.msra.mxu0 0.0
    %1410 = vmatprep.subr.mxu0 0.0
    %1411 = vmatpush1.msra.mxu0 0.0
    %1412 = vmatprep.subr.mxu0 0.0
    %1413 = vmatpush1.msra.mxu0 0.0
    %1414 = vmatprep.subr.mxu0 0.0
    %1415 = vmatpush1.msra.mxu0 0.0
    %1416 = vmatprep.subr.mxu0 0.0
    %1417 = vmatpush1.msra.mxu0 0.0
    %1418 = vmatprep.subr.mxu0 0.0
    %1419 = vmatpush1.msra.mxu0 0.0
    %1420 = vmatprep.subr.mxu0 0.0
    %1421 = vmatpush1.msra.mxu0 0.0
    %1422 = vmatprep.subr.mxu0 0.0
    %1423 = vmatpush1.msra.mxu0 0.0
    %1424 = vmatprep.subr.mxu0 0.0
    %1425 = vmatpush1.msra.mxu0 0.0
    %1426 = vmatprep.subr.mxu0 0.0
    %1427 = vmatpush1.msra.mxu0 0.0
    %1428 = vmatprep.subr.mxu0 0.0
    %1429 = vmatpush1.msra.mxu0 0.0
    %1430 = vmatprep.subr.mxu0 0.0
    %1431 = vmatpush1.msra.mxu0 0.0
    %1432 = vmatprep.subr.mxu0 0.0
    %1433 = vmatpush1.msra.mxu0 0.0
    %1434 = vmatprep.subr.mxu0 0.0
    %1435 = vmatpush1.msra.mxu0 0.0
    %1436 = vmatprep.subr.mxu0 0.0
    %1437 = vmatpush1.msra.mxu0 0.0
    %1438 = vmatprep.subr.mxu0 0.0
    %1439 = vmatpush1.msra.mxu0 0.0
    %1440 = vmatprep.mubr.f32.mxu0 0.0
    %1441 = vmatmul.mubr.f32.gmra.mrb[0].mxu0 %v1371
    %v1442 = vpop.f32.mrb[0].mxu0
    %v1443 = vadd.f32 0.0, %v1442
    %v1444 = vpop.f32.mrb[0].mxu0
    %1445 = vmatprep.mubr.f32.mxu0 0.0
    %1446 = vmatmul.mubr.f32.gmra.mrb[0].mxu0 %v1374
    %v1447 = vpop.f32.mrb[0].mxu0
    %v1448 = vadd.f32 0.0, %v1447
    %v1449 = vpop.f32.mrb[0].mxu0
    %1450 = vdwg.mxu0
    %v1451 = vadd.f32 %v1167, %v1443
    %v1452 = vadd.f32 %v1168, %v1448
    %v1453 = vld [vmem:[%s7] sm:$0x1]
    %v1455 = vlaneseq
    %v1456 = vshrl.u32 %v1455, 7
    %v1457 = vsub.s32 0, %v1456
    %v1458 = vrot.slane %v1453, %v1457
    %v1460 = vadd.f32 %v1451, %v1458
    %v1461 = vadd.f32 %v1452, %v1458
    %1462 = vst.msk [vmem:[#allocation2] sm:$0xff] %vm43, %v1460
    %1463 = vst.msk [vmem:[#allocation2 + $0x8] sm:$0xff] %vm43, %v1461
    // Predicated region
    $region34: #{mhatt_forward.1} parent=1 // pred_check
      _
    $region35: #{mhatt_forward.1} parent=1 // pred_check_branch
      %1465 = sbr.rel (0) target = $region37
    $region36: #{mhatt_forward.1} parent=1 // pred_region
      %s1467 = ssub.s32 256, 256
      %1468 = vsyncadd [#allocation3], %s1467
      %s1469 = sshll.u32 [#allocation2], 4
      %s1470 = int_to_ptr.vmem [resolvable:$true] %s1469
      %1475 = dma.vmem_to_hbm [thread:$0]  %s1470, 256, %s8, [#allocation3], 128, 128, 8
    $region37: #{mhatt_forward.1} parent=1 // pred_fallthru
      _
    // Predicated region
    $region38: #{mhatt_forward.1} parent=1 // pred_check
      _
    $region39: #{mhatt_forward.1} parent=1 // pred_check_branch
      %1477 = sbr.rel (0) target = $region41
    $region40: #{mhatt_forward.1} parent=1 // pred_region
      %1478 = dma.done [#allocation3], 256
    $region41: #{mhatt_forward.1} parent=1 // pred_fallthru
      _
    %1479 = vsyncpa [#allocation3], 1

</llo_original>
